<compile_context>
chip_gen: v7x
topology: tpu7x:2x2x1
jax: 0.10.0
libtpu: 0.0.40
codegen_flags: <defaults>
</compile_context>

<pallas_src>
import jax
import jax.numpy as jnp
from jax import lax
from jax.experimental import pallas as pl
from jax.experimental.pallas import tpu as pltpu

COMPUTE_DTYPE = jnp.bfloat16   # MXU operand dtype; carry/accumulate stay float32
UNROLL_S = 32                  # fully unroll the time loop up to this many steps


# ------------------------------ fused kernel ------------------------------

def _make_fused_kernel(S, nb, H, L, unrolled):
    """Builds the fused encoder+decoder kernel for static shapes."""
    cd = COMPUTE_DTYPE

    def run_stack(get_in, w0, wih_layers, whh_bd, bias_all, wfc, bfc, out_ref):
        """One multi-layer tanh-RNN stack + trailing Linear over the sequence.

        get_in(t) -> (nb, D_in) bf16 input row-block for timestep t.
        w0:         (D_in, H)  bf16  layer-0 input weight (pre-transposed)
        wih_layers: list of (H, H) bf16 layer>=1 input weights
        whh_bd:     (L*H, L*H) bf16  block-diagonal recurrent weight
        bias_all:   (1, L*H)   f32   b_ih + b_hh for every layer (lane-concat)
        wfc:        (H, D_out) bf16 / bfc: (1, D_out) f32
        out_ref:    (S, nb, D_out) f32 output block (the encoder's out_ref is
                                       re-read as the decoder's input).
        """
        h0 = jnp.zeros((nb, L * H), jnp.float32)

        def step(t, h):
            # ONE MXU push for all L recurrent terms (depend only on the t-1
            # state) + ONE broadcast add folding every layer's bias.
            rec = (jnp.dot(h.astype(cd), whh_bd,
                           preferred_element_type=jnp.float32) + bias_all)
            # Layer 0 (the input projection is off the tanh-serial chain and
            # overlaps neighbouring steps once the loop is unrolled).
            prev = jnp.tanh(
                jnp.dot(get_in(t), w0, preferred_element_type=jnp.float32)
                + rec[:, :H])
            parts = [prev]
            # Layers 1..L-1: serial chain (input = previous layer at time t).
            for i, w in enumerate(wih_layers):
                lo = (i + 1) * H
                prev = jnp.tanh(
                    jnp.dot(prev.astype(cd), w,
                            preferred_element_type=jnp.float32)
                    + rec[:, lo:lo + H])
                parts.append(prev)
            # Fused trailing Linear for this timestep, written once from vregs.
            out_ref[t] = (jnp.dot(prev.astype(cd), wfc,
                                  preferred_element_type=jnp.float32) + bfc)
            # Hidden state carried in f32, lane-concatenated (nb, L*H).
            return parts[0] if L == 1 else jnp.concatenate(parts, axis=1)

        if unrolled:
            h = h0
            for t in range(S):            # full unroll: LLO overlaps steps
                h = step(t, h)
        else:
            lax.fori_loop(0, S, step, h0, unroll=min(8, S))

    def kernel(x_ref,
               e_w0_ref, e_wr_ref, e_whh_ref, e_b_ref, e_wfc_ref, e_bfc_ref,
               d_w0_ref, d_wr_ref, d_whh_ref, d_b_ref, d_wfc_ref, d_bfc_ref,
               enc_ref, dec_ref):
        # Hoist all weight/bias loads and per-layer weight slices out of the
        # sequential loops (JAX does not CSE loads emitted inside the loop).
        e_w0, e_wr, e_whh = e_w0_ref[...], e_wr_ref[...], e_whh_ref[...]
        e_b, e_wfc, e_bfc = e_b_ref[...], e_wfc_ref[...], e_bfc_ref[...]
        d_w0, d_wr, d_whh = d_w0_ref[...], d_wr_ref[...], d_whh_ref[...]
        d_b, d_wfc, d_bfc = d_b_ref[...], d_wfc_ref[...], d_bfc_ref[...]
        e_layers = [e_wr[:, i * H:(i + 1) * H] for i in range(L - 1)]
        d_layers = [d_wr[:, i * H:(i + 1) * H] for i in range(L - 1)]

        # ---- encoder: x -> enc_ref ----
        run_stack(lambda t: x_ref[t].astype(cd),
                  e_w0, e_layers, e_whh, e_b, e_wfc, e_bfc, enc_ref)
        # ---- decoder: consumes x_enc straight from VMEM (no HBM round-trip) ----
        run_stack(lambda t: enc_ref[t].astype(cd),
                  d_w0, d_layers, d_whh, d_b, d_wfc, d_bfc, dec_ref)

    return kernel


# -------------------------- VMEM budget / blocking --------------------------

def _vmem_capacity_bytes():
    try:
        return int(pltpu.get_tpu_info().vmem_capacity_bytes)
    except Exception:
        return 64 * 1024 * 1024          # conservative fallback (v7x physical)


def _choose_n_block(S, N, z, H, L, weight_bytes):
    """Largest N-block (multiple of 8, or N itself) that fits the VMEM budget."""
    cap = _vmem_capacity_bytes()
    budget = cap // 2                    # headroom for compiler temporaries

    def need(nb):
        io = 4 * S * nb * (z + H + z)    # x block + enc/dec output blocks (f32)
        work = 4 * nb * L * H * 8        # carried state / live vregs (rough)
        return 2 * io + work + weight_bytes + (2 << 20)

    nb = N
    while need(nb) > budget and nb > 8:
        nb = max(8, (nb // 2 + 7) // 8 * 8)
    if need(nb) > budget:
        # TODO(synk): stream the S (recurrence) axis with manual double-buffered
        # DMA when the full sequence does not fit a single N-block in VMEM.
        raise NotImplementedError("sequence too large for a single-N-block VMEM tile")
    vmem_limit = min(max(2 * need(nb), 32 * 1024 * 1024), int(cap * 0.75))
    return nb, vmem_limit


# ------------------------------ thin wrapper ------------------------------

def stock_embedding_forward_ae(packed, x):
    """x: (batch, ts_size, z_dim) float32  ->  (x_enc, x_dec)   [mode='ae']."""
    S, N, z = x.shape                    # S = batch (recurrence), N = ts_size
    enc, dec = packed['enc'], packed['dec']
    H = enc['wfc'].shape[0]
    L = enc['whh_bd'].shape[0] // H

    weights = (enc['wih0'], enc['wih_rest'], enc['whh_bd'], enc['bias'],
               enc['wfc'], enc['bfc'],
               dec['wih0'], dec['wih_rest'], dec['whh_bd'], dec['bias'],
               dec['wfc'], dec['bfc'])
    weight_bytes = sum(int(w.size) * w.dtype.itemsize for w in weights)
    nb, vmem_limit = _choose_n_block(S, N, z, H, L, weight_bytes)

    def full_spec(a):
        nd = a.ndim
        return pl.BlockSpec(a.shape, lambda j: (0,) * nd)

    kernel = _make_fused_kernel(S, nb, H, L, unrolled=(S <= UNROLL_S))
    x_enc, x_dec = pl.pallas_call(
        kernel,
        grid=(pl.cdiv(N, nb),),
        in_specs=[pl.BlockSpec((S, nb, z), lambda j: (0, j, 0))]
                 + [full_spec(w) for w in weights],
        out_specs=(pl.BlockSpec((S, nb, H), lambda j: (0, j, 0)),
                   pl.BlockSpec((S, nb, z), lambda j: (0, j, 0))),
        out_shape=(jax.ShapeDtypeStruct((S, N, H), jnp.float32),
                   jax.ShapeDtypeStruct((S, N, z), jnp.float32)),
        compiler_params=pltpu.CompilerParams(
            dimension_semantics=("parallel",),
            vmem_limit_bytes=vmem_limit),
    )(x, *weights)
    return x_enc, x_dec


# --------------------------- parameter handling ---------------------------

def _uniform(key, shape, scale):
    return jax.random.uniform(key, shape, jnp.float32, -scale, scale)


def init_stock_embedding_params(cfg, key):
    """Raw parameters in PyTorch convention (W_ih (H, D_in), W_hh (H, H), b (H,))."""
    z, h, L = cfg['z_dim'], cfg['hidden_dim'], cfg['num_layers']
    scale = 1.0 / float(h) ** 0.5
    keys = iter(jax.random.split(key, 8 * L + 8))

    def rnn_stack(input_size):
        layers = []
        for layer in range(L):
            d_in = input_size if layer == 0 else h
            layers.append((
                _uniform(next(keys), (h, d_in), scale),   # W_ih
                _uniform(next(keys), (h, h), scale),      # W_hh
                _uniform(next(keys), (h,), scale),        # b_ih
                _uniform(next(keys), (h,), scale),        # b_hh
            ))
        return layers

    return {
        'enc_rnn': rnn_stack(z),
        'enc_fc_w': _uniform(next(keys), (h, h), scale),
        'enc_fc_b': _uniform(next(keys), (h,), scale),
        'dec_rnn': rnn_stack(h),
        'dec_fc_w': _uniform(next(keys), (z, h), scale),
        'dec_fc_b': _uniform(next(keys), (z,), scale),
    }


def prepare_params(params, compute_dtype=COMPUTE_DTYPE):
    """One-time packing: transpose weights, build the block-diagonal recurrent
    weight, lane-concatenate layer>=1 input weights, combine biases, and cast
    MXU operands to `compute_dtype`.  No per-forward XLA transpose/add/cast
    ops remain in the wrappers."""

    def pack_stack(layers, fc_w, fc_b):
        L = len(layers)
        H = layers[0][1].shape[0]
        wih0 = jnp.asarray(layers[0][0].T, compute_dtype)              # (D_in, H)
        if L > 1:
            wih_rest = jnp.concatenate(
                [jnp.asarray(w.T, compute_dtype) for (w, _, _, _) in layers[1:]],
                axis=1)                                                # (H,(L-1)H)
        else:
            wih_rest = jnp.zeros((H, H), compute_dtype)                # unused
        whh_bd = jnp.zeros((L * H, L * H), jnp.float32)                # block-diag
        for l, (_, whh, _, _) in enumerate(layers):
            whh_bd = whh_bd.at[l * H:(l + 1) * H, l * H:(l + 1) * H].set(whh.T)
        bias = jnp.concatenate(
            [(bih + bhh).astype(jnp.float32) for (_, _, bih, bhh) in layers]
        ).reshape(1, L * H)
        return dict(wih0=wih0, wih_rest=wih_rest,
                    whh_bd=whh_bd.astype(compute_dtype), bias=bias,
                    wfc=jnp.asarray(fc_w.T, compute_dtype),
                    bfc=fc_b.reshape(1, -1).astype(jnp.float32))

    return {
        'enc': pack_stack(params['enc_rnn'], params['enc_fc_w'], params['enc_fc_b']),
        'dec': pack_stack(params['dec_rnn'], params['dec_fc_w'], params['dec_fc_b']),
    }


# --------------------------- pure-JAX references ---------------------------

def _rnn_stack_fc_ref(x, layers, fc_w, fc_b, compute_dtype=COMPUTE_DTYPE):
    """Reference with the kernel's convention: float32 recurrence/accumulate,
    MXU operands (weights + activations) cast to `compute_dtype`.  Pass
    compute_dtype=jnp.float32 for exact PyTorch math."""
    S, N, _ = x.shape
    H = layers[0][1].shape[0]
    cd = compute_dtype
    h = [jnp.zeros((N, H), jnp.float32) for _ in layers]
    outs = []
    for t in range(S):
        inp = x[t]
        for l, (wih, whh, bih, bhh) in enumerate(layers):
            acc = (jnp.dot(inp.astype(cd), wih.T.astype(cd),
                           preferred_element_type=jnp.float32)
                   + jnp.dot(h[l].astype(cd), whh.T.astype(cd),
                             preferred_element_type=jnp.float32)
                   + (bih + bhh).astype(jnp.float32))
            h[l] = jnp.tanh(acc)
            inp = h[l]
        outs.append(inp)
    last = jnp.stack(outs, 0)
    y = (jnp.einsum('snh,kh->snk', last.astype(cd), fc_w.astype(cd),
                    preferred_element_type=jnp.float32)
         + fc_b.astype(jnp.float32))
    return y


# ------------------------------------ main ------------------------------------

if __name__ == "__main__":
    cfg = {
        'z_dim': 4,
        'ts_size': 8,
        'mask_size': 1,
        'num_masks': 3,
        'hidden_dim': 16,
        'embed_dim': 6,
        'num_layers': 3,
        'num_embed': 32,
    }
    cfg['total_mask_size'] = cfg['num_masks'] * cfg['mask_size']

    key = jax.random.PRNGKey(0)
    k_param, k_x = jax.random.split(key)
    params = init_stock_embedding_params(cfg, k_param)
    packed = prepare_params(params)     # transpose / block-diag / combine / cast ONCE

    batch = 2
    x = jax.random.normal(k_x, (batch, cfg['ts_size'], cfg['z_dim']), jnp.float32)

    fwd = jax.jit(stock_embedding_forward_ae)
    x_enc, x_dec = fwd(packed, x)
    x_enc = jax.block_until_ready(x_enc)
    x_dec = jax.block_until_ready(x_dec)

    assert x_enc.shape == (batch, cfg['ts_size'], cfg['hidden_dim'])
    assert x_dec.shape == (batch, cfg['ts_size'], cfg['z_dim'])

    # Tight check vs. a reference using the identical bf16-operand / f32-carry
    # convention (decoder reference consumes the kernel's x_enc).
    ref_enc = _rnn_stack_fc_ref(x, params['enc_rnn'],
                                params['enc_fc_w'], params['enc_fc_b'])
    ref_dec = _rnn_stack_fc_ref(x_enc, params['dec_rnn'],
                                params['dec_fc_w'], params['dec_fc_b'])
    assert bool(jnp.allclose(x_enc, ref_enc, atol=2e-2, rtol=2e-2)), \
        f"enc max |d| = {float(jnp.max(jnp.abs(x_enc - ref_enc)))}"
    assert bool(jnp.allclose(x_dec, ref_dec, atol=2e-2, rtol=2e-2)), \
        f"dec max |d| = {float(jnp.max(jnp.abs(x_dec - ref_dec)))}"

    # Loose sanity vs. exact float32 (original PyTorch) math — bounds the
    # deliberate bf16 weight/operand quantization error.
    f32_enc = _rnn_stack_fc_ref(x, params['enc_rnn'], params['enc_fc_w'],
                                params['enc_fc_b'], compute_dtype=jnp.float32)
    f32_dec = _rnn_stack_fc_ref(f32_enc, params['dec_rnn'], params['dec_fc_w'],
                                params['dec_fc_b'], compute_dtype=jnp.float32)
    assert bool(jnp.allclose(x_enc, f32_enc, atol=1e-1, rtol=1e-1))
    assert bool(jnp.allclose(x_dec, f32_dec, atol=1e-1, rtol=1e-1))

    print("KERNEL_OK")
</pallas_src>

<mosaic_0001>
module attributes {stable_mosaic.version = 11 : i64} {
  func.func @kernel(%arg0: i32, %arg1: memref<2x8x4xf32, #tpu.memory_space<vmem>>, %arg2: memref<4x16xbf16, #tpu.memory_space<vmem>>, %arg3: memref<16x32xbf16, #tpu.memory_space<vmem>>, %arg4: memref<48x48xbf16, #tpu.memory_space<vmem>>, %arg5: memref<1x48xf32, #tpu.memory_space<vmem>>, %arg6: memref<16x16xbf16, #tpu.memory_space<vmem>>, %arg7: memref<1x16xf32, #tpu.memory_space<vmem>>, %arg8: memref<16x16xbf16, #tpu.memory_space<vmem>>, %arg9: memref<16x32xbf16, #tpu.memory_space<vmem>>, %arg10: memref<48x48xbf16, #tpu.memory_space<vmem>>, %arg11: memref<1x48xf32, #tpu.memory_space<vmem>>, %arg12: memref<16x4xbf16, #tpu.memory_space<vmem>>, %arg13: memref<1x4xf32, #tpu.memory_space<vmem>>, %arg14: memref<2x8x16xf32, #tpu.memory_space<vmem>>, %arg15: memref<2x8x4xf32, #tpu.memory_space<vmem>>) attributes {dimension_semantics = [#tpu.dimension_semantics<parallel>], iteration_bounds = array<i64: 1>, scalar_prefetch = 0 : i64, scratch_operands = 0 : i64, tpu.core_type = #tpu.core_type<tc>, window_params = [{transform_indices = @transform_0, window_bounds = array<i64: 2, 8, 4>}, {pipeline_mode = #tpu.pipeline_mode<synchronous>, transform_indices = @transform_1, window_bounds = array<i64: 4, 16>}, {pipeline_mode = #tpu.pipeline_mode<synchronous>, transform_indices = @transform_2, window_bounds = array<i64: 16, 32>}, {pipeline_mode = #tpu.pipeline_mode<synchronous>, transform_indices = @transform_3, window_bounds = array<i64: 48, 48>}, {pipeline_mode = #tpu.pipeline_mode<synchronous>, transform_indices = @transform_4, window_bounds = array<i64: 1, 48>}, {pipeline_mode = #tpu.pipeline_mode<synchronous>, transform_indices = @transform_5, window_bounds = array<i64: 16, 16>}, {pipeline_mode = #tpu.pipeline_mode<synchronous>, transform_indices = @transform_6, window_bounds = array<i64: 1, 16>}, {pipeline_mode = #tpu.pipeline_mode<synchronous>, transform_indices = @transform_7, window_bounds = array<i64: 16, 16>}, {pipeline_mode = #tpu.pipeline_mode<synchronous>, transform_indices = @transform_8, window_bounds = array<i64: 16, 32>}, {pipeline_mode = #tpu.pipeline_mode<synchronous>, transform_indices = @transform_9, window_bounds = array<i64: 48, 48>}, {pipeline_mode = #tpu.pipeline_mode<synchronous>, transform_indices = @transform_10, window_bounds = array<i64: 1, 48>}, {pipeline_mode = #tpu.pipeline_mode<synchronous>, transform_indices = @transform_11, window_bounds = array<i64: 16, 4>}, {pipeline_mode = #tpu.pipeline_mode<synchronous>, transform_indices = @transform_12, window_bounds = array<i64: 1, 4>}, {transform_indices = @transform_13, window_bounds = array<i64: 2, 8, 16>}, {transform_indices = @transform_14, window_bounds = array<i64: 2, 8, 4>}]} {
    %c0 = arith.constant 0 : index
    %c0_0 = arith.constant 0 : index
    %0 = vector.load %arg2[%c0, %c0_0] : memref<4x16xbf16, #tpu.memory_space<vmem>>, vector<4x16xbf16>
    %c0_1 = arith.constant 0 : index
    %c0_2 = arith.constant 0 : index
    %1 = vector.load %arg3[%c0_1, %c0_2] : memref<16x32xbf16, #tpu.memory_space<vmem>>, vector<16x32xbf16>
    %c0_3 = arith.constant 0 : index
    %c0_4 = arith.constant 0 : index
    %2 = vector.load %arg4[%c0_3, %c0_4] : memref<48x48xbf16, #tpu.memory_space<vmem>>, vector<48x48xbf16>
    %c0_5 = arith.constant 0 : index
    %c0_6 = arith.constant 0 : index
    %3 = vector.load %arg5[%c0_5, %c0_6] : memref<1x48xf32, #tpu.memory_space<vmem>>, vector<1x48xf32>
    %c0_7 = arith.constant 0 : index
    %c0_8 = arith.constant 0 : index
    %4 = vector.load %arg6[%c0_7, %c0_8] : memref<16x16xbf16, #tpu.memory_space<vmem>>, vector<16x16xbf16>
    %c0_9 = arith.constant 0 : index
    %c0_10 = arith.constant 0 : index
    %5 = vector.load %arg7[%c0_9, %c0_10] : memref<1x16xf32, #tpu.memory_space<vmem>>, vector<1x16xf32>
    %c0_11 = arith.constant 0 : index
    %c0_12 = arith.constant 0 : index
    %6 = vector.load %arg8[%c0_11, %c0_12] : memref<16x16xbf16, #tpu.memory_space<vmem>>, vector<16x16xbf16>
    %c0_13 = arith.constant 0 : index
    %c0_14 = arith.constant 0 : index
    %7 = vector.load %arg9[%c0_13, %c0_14] : memref<16x32xbf16, #tpu.memory_space<vmem>>, vector<16x32xbf16>
    %c0_15 = arith.constant 0 : index
    %c0_16 = arith.constant 0 : index
    %8 = vector.load %arg10[%c0_15, %c0_16] : memref<48x48xbf16, #tpu.memory_space<vmem>>, vector<48x48xbf16>
    %c0_17 = arith.constant 0 : index
    %c0_18 = arith.constant 0 : index
    %9 = vector.load %arg11[%c0_17, %c0_18] : memref<1x48xf32, #tpu.memory_space<vmem>>, vector<1x48xf32>
    %c0_19 = arith.constant 0 : index
    %c0_20 = arith.constant 0 : index
    %10 = vector.load %arg12[%c0_19, %c0_20] : memref<16x4xbf16, #tpu.memory_space<vmem>>, vector<16x4xbf16>
    %c0_21 = arith.constant 0 : index
    %c0_22 = arith.constant 0 : index
    %11 = vector.load %arg13[%c0_21, %c0_22] : memref<1x4xf32, #tpu.memory_space<vmem>>, vector<1x4xf32>
    %12 = vector.extract_strided_slice %1 {offsets = [0, 0], sizes = [16, 16], strides = [1, 1]} : vector<16x32xbf16> to vector<16x16xbf16>
    %13 = vector.extract_strided_slice %1 {offsets = [0, 16], sizes = [16, 16], strides = [1, 1]} : vector<16x32xbf16> to vector<16x16xbf16>
    %14 = vector.extract_strided_slice %7 {offsets = [0, 0], sizes = [16, 16], strides = [1, 1]} : vector<16x32xbf16> to vector<16x16xbf16>
    %15 = vector.extract_strided_slice %7 {offsets = [0, 16], sizes = [16, 16], strides = [1, 1]} : vector<16x32xbf16> to vector<16x16xbf16>
    %cst = arith.constant 0.000000e+00 : f32
    %16 = vector.broadcast %cst : f32 to vector<8x48xf32>
    %17 = arith.truncf %16 : vector<8x48xf32> to vector<8x48xbf16>
    %cst_23 = arith.constant dense<0.000000e+00> : vector<8x48xf32>
    %18 = tpu.matmul %17, %2, %cst_23 {dimension_numbers = #tpu.dot_dimension_numbers<[1], [0], [0], [1], [0, 0, 1, 1], [], []>} : vector<8x48xbf16>, vector<48x48xbf16>, vector<8x48xf32> -> vector<8x48xf32>
    %19 = vector.broadcast %3 : vector<1x48xf32> to vector<8x48xf32>
    %20 = arith.addf %18, %19 : vector<8x48xf32>
    %c0_24 = arith.constant 0 : index
    %c0_25 = arith.constant 0 : index
    %c0_26 = arith.constant 0 : index
    %21 = vector.load %arg1[%c0_24, %c0_25, %c0_26] : memref<2x8x4xf32, #tpu.memory_space<vmem>>, vector<1x8x4xf32>
    %22 = vector.shape_cast %21 : vector<1x8x4xf32> to vector<8x4xf32>
    %23 = arith.truncf %22 : vector<8x4xf32> to vector<8x4xbf16>
    %cst_27 = arith.constant dense<0.000000e+00> : vector<8x16xf32>
    %24 = tpu.matmul %23, %0, %cst_27 {dimension_numbers = #tpu.dot_dimension_numbers<[1], [0], [0], [1], [0, 0, 1, 1], [], []>} : vector<8x4xbf16>, vector<4x16xbf16>, vector<8x16xf32> -> vector<8x16xf32>
    %25 = vector.extract_strided_slice %20 {offsets = [0, 0], sizes = [8, 16], strides = [1, 1]} : vector<8x48xf32> to vector<8x16xf32>
    %26 = arith.addf %24, %25 : vector<8x16xf32>
    %27 = math.tanh %26 : vector<8x16xf32>
    %28 = arith.truncf %27 : vector<8x16xf32> to vector<8x16xbf16>
    %cst_28 = arith.constant dense<0.000000e+00> : vector<8x16xf32>
    %29 = tpu.matmul %28, %12, %cst_28 {dimension_numbers = #tpu.dot_dimension_numbers<[1], [0], [0], [1], [0, 0, 1, 1], [], []>} : vector<8x16xbf16>, vector<16x16xbf16>, vector<8x16xf32> -> vector<8x16xf32>
    %30 = vector.extract_strided_slice %20 {offsets = [0, 16], sizes = [8, 16], strides = [1, 1]} : vector<8x48xf32> to vector<8x16xf32>
    %31 = arith.addf %29, %30 : vector<8x16xf32>
    %32 = math.tanh %31 : vector<8x16xf32>
    %33 = arith.truncf %32 : vector<8x16xf32> to vector<8x16xbf16>
    %cst_29 = arith.constant dense<0.000000e+00> : vector<8x16xf32>
    %34 = tpu.matmul %33, %13, %cst_29 {dimension_numbers = #tpu.dot_dimension_numbers<[1], [0], [0], [1], [0, 0, 1, 1], [], []>} : vector<8x16xbf16>, vector<16x16xbf16>, vector<8x16xf32> -> vector<8x16xf32>
    %35 = vector.extract_strided_slice %20 {offsets = [0, 32], sizes = [8, 16], strides = [1, 1]} : vector<8x48xf32> to vector<8x16xf32>
    %36 = arith.addf %34, %35 : vector<8x16xf32>
    %37 = math.tanh %36 : vector<8x16xf32>
    %38 = arith.truncf %37 : vector<8x16xf32> to vector<8x16xbf16>
    %cst_30 = arith.constant dense<0.000000e+00> : vector<8x16xf32>
    %39 = tpu.matmul %38, %4, %cst_30 {dimension_numbers = #tpu.dot_dimension_numbers<[1], [0], [0], [1], [0, 0, 1, 1], [], []>} : vector<8x16xbf16>, vector<16x16xbf16>, vector<8x16xf32> -> vector<8x16xf32>
    %40 = vector.broadcast %5 : vector<1x16xf32> to vector<8x16xf32>
    %41 = arith.addf %39, %40 : vector<8x16xf32>
    %c0_31 = arith.constant 0 : index
    %c0_32 = arith.constant 0 : index
    %c0_33 = arith.constant 0 : index
    %42 = vector.load %arg14[%c0_31, %c0_32, %c0_33] : memref<2x8x16xf32, #tpu.memory_space<vmem>>, vector<1x8x16xf32>
    %43 = vector.shape_cast %42 : vector<1x8x16xf32> to vector<8x16xf32>
    %44 = vector.shape_cast %41 : vector<8x16xf32> to vector<1x8x16xf32>
    tpu.vector_store %arg14[%c0_31, %c0_32, %c0_33], %44 {strides = array<i32>} : memref<2x8x16xf32, #tpu.memory_space<vmem>>, vector<1x8x16xf32>,
    %45 = tpu.concatenate %27, %32, %37 in 1 : vector<8x16xf32>, vector<8x16xf32>, vector<8x16xf32> -> vector<8x48xf32>
    %46 = arith.truncf %45 : vector<8x48xf32> to vector<8x48xbf16>
    %cst_34 = arith.constant dense<0.000000e+00> : vector<8x48xf32>
    %47 = tpu.matmul %46, %2, %cst_34 {dimension_numbers = #tpu.dot_dimension_numbers<[1], [0], [0], [1], [0, 0, 1, 1], [], []>} : vector<8x48xbf16>, vector<48x48xbf16>, vector<8x48xf32> -> vector<8x48xf32>
    %48 = vector.broadcast %3 : vector<1x48xf32> to vector<8x48xf32>
    %49 = arith.addf %47, %48 : vector<8x48xf32>
    %c1 = arith.constant 1 : index
    %c0_35 = arith.constant 0 : index
    %c0_36 = arith.constant 0 : index
    %50 = vector.load %arg1[%c1, %c0_35, %c0_36] : memref<2x8x4xf32, #tpu.memory_space<vmem>>, vector<1x8x4xf32>
    %51 = vector.shape_cast %50 : vector<1x8x4xf32> to vector<8x4xf32>
    %52 = arith.truncf %51 : vector<8x4xf32> to vector<8x4xbf16>
    %cst_37 = arith.constant dense<0.000000e+00> : vector<8x16xf32>
    %53 = tpu.matmul %52, %0, %cst_37 {dimension_numbers = #tpu.dot_dimension_numbers<[1], [0], [0], [1], [0, 0, 1, 1], [], []>} : vector<8x4xbf16>, vector<4x16xbf16>, vector<8x16xf32> -> vector<8x16xf32>
    %54 = vector.extract_strided_slice %49 {offsets = [0, 0], sizes = [8, 16], strides = [1, 1]} : vector<8x48xf32> to vector<8x16xf32>
    %55 = arith.addf %53, %54 : vector<8x16xf32>
    %56 = math.tanh %55 : vector<8x16xf32>
    %57 = arith.truncf %56 : vector<8x16xf32> to vector<8x16xbf16>
    %cst_38 = arith.constant dense<0.000000e+00> : vector<8x16xf32>
    %58 = tpu.matmul %57, %12, %cst_38 {dimension_numbers = #tpu.dot_dimension_numbers<[1], [0], [0], [1], [0, 0, 1, 1], [], []>} : vector<8x16xbf16>, vector<16x16xbf16>, vector<8x16xf32> -> vector<8x16xf32>
    %59 = vector.extract_strided_slice %49 {offsets = [0, 16], sizes = [8, 16], strides = [1, 1]} : vector<8x48xf32> to vector<8x16xf32>
    %60 = arith.addf %58, %59 : vector<8x16xf32>
    %61 = math.tanh %60 : vector<8x16xf32>
    %62 = arith.truncf %61 : vector<8x16xf32> to vector<8x16xbf16>
    %cst_39 = arith.constant dense<0.000000e+00> : vector<8x16xf32>
    %63 = tpu.matmul %62, %13, %cst_39 {dimension_numbers = #tpu.dot_dimension_numbers<[1], [0], [0], [1], [0, 0, 1, 1], [], []>} : vector<8x16xbf16>, vector<16x16xbf16>, vector<8x16xf32> -> vector<8x16xf32>
    %64 = vector.extract_strided_slice %49 {offsets = [0, 32], sizes = [8, 16], strides = [1, 1]} : vector<8x48xf32> to vector<8x16xf32>
    %65 = arith.addf %63, %64 : vector<8x16xf32>
    %66 = math.tanh %65 : vector<8x16xf32>
    %67 = arith.truncf %66 : vector<8x16xf32> to vector<8x16xbf16>
    %cst_40 = arith.constant dense<0.000000e+00> : vector<8x16xf32>
    %68 = tpu.matmul %67, %4, %cst_40 {dimension_numbers = #tpu.dot_dimension_numbers<[1], [0], [0], [1], [0, 0, 1, 1], [], []>} : vector<8x16xbf16>, vector<16x16xbf16>, vector<8x16xf32> -> vector<8x16xf32>
    %69 = vector.broadcast %5 : vector<1x16xf32> to vector<8x16xf32>
    %70 = arith.addf %68, %69 : vector<8x16xf32>
    %c1_41 = arith.constant 1 : index
    %c0_42 = arith.constant 0 : index
    %c0_43 = arith.constant 0 : index
    %71 = vector.load %arg14[%c1_41, %c0_42, %c0_43] : memref<2x8x16xf32, #tpu.memory_space<vmem>>, vector<1x8x16xf32>
    %72 = vector.shape_cast %71 : vector<1x8x16xf32> to vector<8x16xf32>
    %73 = vector.shape_cast %70 : vector<8x16xf32> to vector<1x8x16xf32>
    tpu.vector_store %arg14[%c1_41, %c0_42, %c0_43], %73 {strides = array<i32>} : memref<2x8x16xf32, #tpu.memory_space<vmem>>, vector<1x8x16xf32>,
    %cst_44 = arith.constant 0.000000e+00 : f32
    %74 = vector.broadcast %cst_44 : f32 to vector<8x48xf32>
    %75 = arith.truncf %74 : vector<8x48xf32> to vector<8x48xbf16>
    %cst_45 = arith.constant dense<0.000000e+00> : vector<8x48xf32>
    %76 = tpu.matmul %75, %8, %cst_45 {dimension_numbers = #tpu.dot_dimension_numbers<[1], [0], [0], [1], [0, 0, 1, 1], [], []>} : vector<8x48xbf16>, vector<48x48xbf16>, vector<8x48xf32> -> vector<8x48xf32>
    %77 = vector.broadcast %9 : vector<1x48xf32> to vector<8x48xf32>
    %78 = arith.addf %76, %77 : vector<8x48xf32>
    %c0_46 = arith.constant 0 : index
    %c0_47 = arith.constant 0 : index
    %c0_48 = arith.constant 0 : index
    %79 = vector.load %arg14[%c0_46, %c0_47, %c0_48] : memref<2x8x16xf32, #tpu.memory_space<vmem>>, vector<1x8x16xf32>
    %80 = vector.shape_cast %79 : vector<1x8x16xf32> to vector<8x16xf32>
    %81 = arith.truncf %80 : vector<8x16xf32> to vector<8x16xbf16>
    %cst_49 = arith.constant dense<0.000000e+00> : vector<8x16xf32>
    %82 = tpu.matmul %81, %6, %cst_49 {dimension_numbers = #tpu.dot_dimension_numbers<[1], [0], [0], [1], [0, 0, 1, 1], [], []>} : vector<8x16xbf16>, vector<16x16xbf16>, vector<8x16xf32> -> vector<8x16xf32>
    %83 = vector.extract_strided_slice %78 {offsets = [0, 0], sizes = [8, 16], strides = [1, 1]} : vector<8x48xf32> to vector<8x16xf32>
    %84 = arith.addf %82, %83 : vector<8x16xf32>
    %85 = math.tanh %84 : vector<8x16xf32>
    %86 = arith.truncf %85 : vector<8x16xf32> to vector<8x16xbf16>
    %cst_50 = arith.constant dense<0.000000e+00> : vector<8x16xf32>
    %87 = tpu.matmul %86, %14, %cst_50 {dimension_numbers = #tpu.dot_dimension_numbers<[1], [0], [0], [1], [0, 0, 1, 1], [], []>} : vector<8x16xbf16>, vector<16x16xbf16>, vector<8x16xf32> -> vector<8x16xf32>
    %88 = vector.extract_strided_slice %78 {offsets = [0, 16], sizes = [8, 16], strides = [1, 1]} : vector<8x48xf32> to vector<8x16xf32>
    %89 = arith.addf %87, %88 : vector<8x16xf32>
    %90 = math.tanh %89 : vector<8x16xf32>
    %91 = arith.truncf %90 : vector<8x16xf32> to vector<8x16xbf16>
    %cst_51 = arith.constant dense<0.000000e+00> : vector<8x16xf32>
    %92 = tpu.matmul %91, %15, %cst_51 {dimension_numbers = #tpu.dot_dimension_numbers<[1], [0], [0], [1], [0, 0, 1, 1], [], []>} : vector<8x16xbf16>, vector<16x16xbf16>, vector<8x16xf32> -> vector<8x16xf32>
    %93 = vector.extract_strided_slice %78 {offsets = [0, 32], sizes = [8, 16], strides = [1, 1]} : vector<8x48xf32> to vector<8x16xf32>
    %94 = arith.addf %92, %93 : vector<8x16xf32>
    %95 = math.tanh %94 : vector<8x16xf32>
    %96 = arith.truncf %95 : vector<8x16xf32> to vector<8x16xbf16>
    %cst_52 = arith.constant dense<0.000000e+00> : vector<8x4xf32>
    %97 = tpu.matmul %96, %10, %cst_52 {dimension_numbers = #tpu.dot_dimension_numbers<[1], [0], [0], [1], [0, 0, 1, 1], [], []>} : vector<8x16xbf16>, vector<16x4xbf16>, vector<8x4xf32> -> vector<8x4xf32>
    %98 = vector.broadcast %11 : vector<1x4xf32> to vector<8x4xf32>
    %99 = arith.addf %97, %98 : vector<8x4xf32>
    %c0_53 = arith.constant 0 : index
    %c0_54 = arith.constant 0 : index
    %c0_55 = arith.constant 0 : index
    %100 = vector.load %arg15[%c0_53, %c0_54, %c0_55] : memref<2x8x4xf32, #tpu.memory_space<vmem>>, vector<1x8x4xf32>
    %101 = vector.shape_cast %100 : vector<1x8x4xf32> to vector<8x4xf32>
    %102 = vector.shape_cast %99 : vector<8x4xf32> to vector<1x8x4xf32>
    tpu.vector_store %arg15[%c0_53, %c0_54, %c0_55], %102 {strides = array<i32>} : memref<2x8x4xf32, #tpu.memory_space<vmem>>, vector<1x8x4xf32>,
    %103 = tpu.concatenate %85, %90, %95 in 1 : vector<8x16xf32>, vector<8x16xf32>, vector<8x16xf32> -> vector<8x48xf32>
    %104 = arith.truncf %103 : vector<8x48xf32> to vector<8x48xbf16>
    %cst_56 = arith.constant dense<0.000000e+00> : vector<8x48xf32>
    %105 = tpu.matmul %104, %8, %cst_56 {dimension_numbers = #tpu.dot_dimension_numbers<[1], [0], [0], [1], [0, 0, 1, 1], [], []>} : vector<8x48xbf16>, vector<48x48xbf16>, vector<8x48xf32> -> vector<8x48xf32>
    %106 = vector.broadcast %9 : vector<1x48xf32> to vector<8x48xf32>
    %107 = arith.addf %105, %106 : vector<8x48xf32>
    %c1_57 = arith.constant 1 : index
    %c0_58 = arith.constant 0 : index
    %c0_59 = arith.constant 0 : index
    %108 = vector.load %arg14[%c1_57, %c0_58, %c0_59] : memref<2x8x16xf32, #tpu.memory_space<vmem>>, vector<1x8x16xf32>
    %109 = vector.shape_cast %108 : vector<1x8x16xf32> to vector<8x16xf32>
    %110 = arith.truncf %109 : vector<8x16xf32> to vector<8x16xbf16>
    %cst_60 = arith.constant dense<0.000000e+00> : vector<8x16xf32>
    %111 = tpu.matmul %110, %6, %cst_60 {dimension_numbers = #tpu.dot_dimension_numbers<[1], [0], [0], [1], [0, 0, 1, 1], [], []>} : vector<8x16xbf16>, vector<16x16xbf16>, vector<8x16xf32> -> vector<8x16xf32>
    %112 = vector.extract_strided_slice %107 {offsets = [0, 0], sizes = [8, 16], strides = [1, 1]} : vector<8x48xf32> to vector<8x16xf32>
    %113 = arith.addf %111, %112 : vector<8x16xf32>
    %114 = math.tanh %113 : vector<8x16xf32>
    %115 = arith.truncf %114 : vector<8x16xf32> to vector<8x16xbf16>
    %cst_61 = arith.constant dense<0.000000e+00> : vector<8x16xf32>
    %116 = tpu.matmul %115, %14, %cst_61 {dimension_numbers = #tpu.dot_dimension_numbers<[1], [0], [0], [1], [0, 0, 1, 1], [], []>} : vector<8x16xbf16>, vector<16x16xbf16>, vector<8x16xf32> -> vector<8x16xf32>
    %117 = vector.extract_strided_slice %107 {offsets = [0, 16], sizes = [8, 16], strides = [1, 1]} : vector<8x48xf32> to vector<8x16xf32>
    %118 = arith.addf %116, %117 : vector<8x16xf32>
    %119 = math.tanh %118 : vector<8x16xf32>
    %120 = arith.truncf %119 : vector<8x16xf32> to vector<8x16xbf16>
    %cst_62 = arith.constant dense<0.000000e+00> : vector<8x16xf32>
    %121 = tpu.matmul %120, %15, %cst_62 {dimension_numbers = #tpu.dot_dimension_numbers<[1], [0], [0], [1], [0, 0, 1, 1], [], []>} : vector<8x16xbf16>, vector<16x16xbf16>, vector<8x16xf32> -> vector<8x16xf32>
    %122 = vector.extract_strided_slice %107 {offsets = [0, 32], sizes = [8, 16], strides = [1, 1]} : vector<8x48xf32> to vector<8x16xf32>
    %123 = arith.addf %121, %122 : vector<8x16xf32>
    %124 = math.tanh %123 : vector<8x16xf32>
    %125 = arith.truncf %124 : vector<8x16xf32> to vector<8x16xbf16>
    %cst_63 = arith.constant dense<0.000000e+00> : vector<8x4xf32>
    %126 = tpu.matmul %125, %10, %cst_63 {dimension_numbers = #tpu.dot_dimension_numbers<[1], [0], [0], [1], [0, 0, 1, 1], [], []>} : vector<8x16xbf16>, vector<16x4xbf16>, vector<8x4xf32> -> vector<8x4xf32>
    %127 = vector.broadcast %11 : vector<1x4xf32> to vector<8x4xf32>
    %128 = arith.addf %126, %127 : vector<8x4xf32>
    %c1_64 = arith.constant 1 : index
    %c0_65 = arith.constant 0 : index
    %c0_66 = arith.constant 0 : index
    %129 = vector.load %arg15[%c1_64, %c0_65, %c0_66] : memref<2x8x4xf32, #tpu.memory_space<vmem>>, vector<1x8x4xf32>
    %130 = vector.shape_cast %129 : vector<1x8x4xf32> to vector<8x4xf32>
    %131 = vector.shape_cast %128 : vector<8x4xf32> to vector<1x8x4xf32>
    tpu.vector_store %arg15[%c1_64, %c0_65, %c0_66], %131 {strides = array<i32>} : memref<2x8x4xf32, #tpu.memory_space<vmem>>, vector<1x8x4xf32>,
    return
  }
  func.func @transform_0(%arg0: i32) -> (i32, i32, i32) {
    %c0_i32 = arith.constant 0 : i32
    %c0_i32_0 = arith.constant 0 : i32
    %c0_i32_1 = arith.constant 0 : i32
    return %c0_i32, %arg0, %c0_i32_0 : i32, i32, i32
  }
  func.func @transform_1(%arg0: i32) -> (i32, i32) {
    %c0_i32 = arith.constant 0 : i32
    %c0_i32_0 = arith.constant 0 : i32
    %c0_i32_1 = arith.constant 0 : i32
    return %c0_i32, %c0_i32_0 : i32, i32
  }
  func.func @transform_2(%arg0: i32) -> (i32, i32) {
    %c0_i32 = arith.constant 0 : i32
    %c0_i32_0 = arith.constant 0 : i32
    %c0_i32_1 = arith.constant 0 : i32
    return %c0_i32, %c0_i32_0 : i32, i32
  }
  func.func @transform_3(%arg0: i32) -> (i32, i32) {
    %c0_i32 = arith.constant 0 : i32
    %c0_i32_0 = arith.constant 0 : i32
    %c0_i32_1 = arith.constant 0 : i32
    return %c0_i32, %c0_i32_0 : i32, i32
  }
  func.func @transform_4(%arg0: i32) -> (i32, i32) {
    %c0_i32 = arith.constant 0 : i32
    %c0_i32_0 = arith.constant 0 : i32
    %c0_i32_1 = arith.constant 0 : i32
    return %c0_i32, %c0_i32_0 : i32, i32
  }
  func.func @transform_5(%arg0: i32) -> (i32, i32) {
    %c0_i32 = arith.constant 0 : i32
    %c0_i32_0 = arith.constant 0 : i32
    %c0_i32_1 = arith.constant 0 : i32
    return %c0_i32, %c0_i32_0 : i32, i32
  }
  func.func @transform_6(%arg0: i32) -> (i32, i32) {
    %c0_i32 = arith.constant 0 : i32
    %c0_i32_0 = arith.constant 0 : i32
    %c0_i32_1 = arith.constant 0 : i32
    return %c0_i32, %c0_i32_0 : i32, i32
  }
  func.func @transform_7(%arg0: i32) -> (i32, i32) {
    %c0_i32 = arith.constant 0 : i32
    %c0_i32_0 = arith.constant 0 : i32
    %c0_i32_1 = arith.constant 0 : i32
    return %c0_i32, %c0_i32_0 : i32, i32
  }
  func.func @transform_8(%arg0: i32) -> (i32, i32) {
    %c0_i32 = arith.constant 0 : i32
    %c0_i32_0 = arith.constant 0 : i32
    %c0_i32_1 = arith.constant 0 : i32
    return %c0_i32, %c0_i32_0 : i32, i32
  }
  func.func @transform_9(%arg0: i32) -> (i32, i32) {
    %c0_i32 = arith.constant 0 : i32
    %c0_i32_0 = arith.constant 0 : i32
    %c0_i32_1 = arith.constant 0 : i32
    return %c0_i32, %c0_i32_0 : i32, i32
  }
  func.func @transform_10(%arg0: i32) -> (i32, i32) {
    %c0_i32 = arith.constant 0 : i32
    %c0_i32_0 = arith.constant 0 : i32
    %c0_i32_1 = arith.constant 0 : i32
    return %c0_i32, %c0_i32_0 : i32, i32
  }
  func.func @transform_11(%arg0: i32) -> (i32, i32) {
    %c0_i32 = arith.constant 0 : i32
    %c0_i32_0 = arith.constant 0 : i32
    %c0_i32_1 = arith.constant 0 : i32
    return %c0_i32, %c0_i32_0 : i32, i32
  }
  func.func @transform_12(%arg0: i32) -> (i32, i32) {
    %c0_i32 = arith.constant 0 : i32
    %c0_i32_0 = arith.constant 0 : i32
    %c0_i32_1 = arith.constant 0 : i32
    return %c0_i32, %c0_i32_0 : i32, i32
  }
  func.func @transform_13(%arg0: i32) -> (i32, i32, i32) {
    %c0_i32 = arith.constant 0 : i32
    %c0_i32_0 = arith.constant 0 : i32
    %c0_i32_1 = arith.constant 0 : i32
    return %c0_i32, %arg0, %c0_i32_0 : i32, i32, i32
  }
  func.func @transform_14(%arg0: i32) -> (i32, i32, i32) {
    %c0_i32 = arith.constant 0 : i32
    %c0_i32_0 = arith.constant 0 : i32
    %c0_i32_1 = arith.constant 0 : i32
    return %c0_i32, %arg0, %c0_i32_0 : i32, i32, i32
  }
}

</mosaic_0001>

<llo_original>
// kernel: stock_embedding_forward_ae.1
$region0: #{stock_embedding_forward_ae.1}
  #allocation0 [shape = 'u32[]', space=smem, size = 0x4, offset = 0x4, fixed_abs, tag = 'smem constant byte address 0x4 - core index']
  #allocation1 [shape = 'u32[144,128]{1,0:T(1,128)}', space=vmem, size = 0x12000, scoped, tag = 'internal scratch']
  %s0 = inlined_call_operand.vmem [shape: f32[2,8,4], index: 0, kind: input, shape index: {}]
  %s1 = inlined_call_operand.vmem [shape: bf16[4,16], index: 1, kind: input, shape index: {}]
  %s2 = inlined_call_operand.vmem [shape: bf16[16,32], index: 2, kind: input, shape index: {}]
  %s3 = inlined_call_operand.vmem [shape: bf16[48,48], index: 3, kind: input, shape index: {}]
  %s4 = inlined_call_operand.hbm [shape: f32[1,48], index: 4, kind: input, shape index: {}]
  %s5 = inlined_call_operand.hbm [shape: bf16[16,16], index: 5, kind: input, shape index: {}]
  %s6 = inlined_call_operand.hbm [shape: f32[1,16], index: 6, kind: input, shape index: {}]
  %s7 = inlined_call_operand.hbm [shape: bf16[16,16], index: 7, kind: input, shape index: {}]
  %s8 = inlined_call_operand.hbm [shape: bf16[16,32], index: 8, kind: input, shape index: {}]
  %s9 = inlined_call_operand.vmem [shape: bf16[48,48], index: 9, kind: input, shape index: {}]
  %s10 = inlined_call_operand.hbm [shape: f32[1,48], index: 10, kind: input, shape index: {}]
  %s11 = inlined_call_operand.vmem [shape: bf16[16,4], index: 11, kind: input, shape index: {}]
  %s12 = inlined_call_operand.hbm [shape: f32[1,4], index: 12, kind: input, shape index: {}]
  %s13 = inlined_call_operand.hbm [shape: f32[2,8,16], index: 13, kind: output, shape index: {0}]
  %s14 = inlined_call_operand.vmem [shape: f32[2,8,4], index: 14, kind: output, shape index: {1}]
  %15 = xla_tuple %s13, %s14
  %s16 = sld [smem:[#allocation0]]
  $region98: #{stock_embedding_forward_ae.1} parent=0
    _
  %s18 = ssub.s32 1, %s16
  %s19 = scalar_select 0, %s18, %s16
  $region1: #{stock_embedding_forward_ae.1} parent=0
    #allocation2 [shape = 'u8[512]{0}', space=vmem, size = 0x400, scoped, tag = 'input window, operand 4, single buffered']
    #allocation3 [shape = 's32[1]{0}', space=sflag, size = 0x4, scoped, tag = 'scoped memory for stock_embedding_forward_ae.1']
    #allocation4 [shape = 's32[1]{0}', space=sflag, size = 0x4, scoped, tag = 'scoped memory for stock_embedding_forward_ae.1']
    #allocation5 [shape = 'u8[4096]{0}', space=vmem, size = 0x1000, scoped, tag = 'input window, operand 5, single buffered']
    #allocation6 [shape = 's32[1]{0}', space=sflag, size = 0x4, scoped, tag = 'scoped memory for stock_embedding_forward_ae.1']
    #allocation7 [shape = 'u8[512]{0}', space=vmem, size = 0x400, scoped, tag = 'input window, operand 6, single buffered']
    #allocation8 [shape = 'u8[4096]{0}', space=vmem, size = 0x1000, scoped, tag = 'input window, operand 7, single buffered']
    #allocation9 [shape = 's32[1]{0}', space=sflag, size = 0x4, scoped, tag = 'scoped memory for stock_embedding_forward_ae.1']
    #allocation10 [shape = 'u8[4096]{0}', space=vmem, size = 0x1000, scoped, tag = 'input window, operand 8, single buffered']
    #allocation11 [shape = 'u8[512]{0}', space=vmem, size = 0x400, scoped, tag = 'input window, operand 10, single buffered']
    #allocation12 [shape = 's32[1]{0}', space=sflag, size = 0x4, scoped, tag = 'scoped memory for stock_embedding_forward_ae.1']
    #allocation13 [shape = 'u8[512]{0}', space=vmem, size = 0x400, scoped, tag = 'input window, operand 12, single buffered']
    #allocation14 [shape = 'u8[8192]{0}', space=vmem, size = 0x2000, scoped, tag = 'output window, operand 0, single buffered']
    %20 = vsyncpa [#allocation3], 0
    %21 = vsyncpa [#allocation6], 0
    %22 = vsyncpa [#allocation9], 0
    %23 = vsyncpa [#allocation12], 0
    %24 = vsyncpa [#allocation4], 0
    // Predicated region
    $region2: #{stock_embedding_forward_ae.1} parent=1 // pred_check
      _
    $region3: #{stock_embedding_forward_ae.1} parent=1 // pred_check_branch
      %26 = sbr.rel (0) target = $region5
    $region4: #{stock_embedding_forward_ae.1} parent=1 // pred_region
      _
    $region5: #{stock_embedding_forward_ae.1} parent=1 // pred_fallthru
      _
    // Predicated region
    $region6: #{stock_embedding_forward_ae.1} parent=1 // pred_check
      _
    $region7: #{stock_embedding_forward_ae.1} parent=1 // pred_check_branch
      %28 = sbr.rel (0) target = $region9
    $region8: #{stock_embedding_forward_ae.1} parent=1 // pred_region
      _
    $region9: #{stock_embedding_forward_ae.1} parent=1 // pred_fallthru
      _
    // Predicated region
    $region10: #{stock_embedding_forward_ae.1} parent=1 // pred_check
      _
    $region11: #{stock_embedding_forward_ae.1} parent=1 // pred_check_branch
      %30 = sbr.rel (0) target = $region13
    $region12: #{stock_embedding_forward_ae.1} parent=1 // pred_region
      _
    $region13: #{stock_embedding_forward_ae.1} parent=1 // pred_fallthru
      _
    // Predicated region
    $region14: #{stock_embedding_forward_ae.1} parent=1 // pred_check
      _
    $region15: #{stock_embedding_forward_ae.1} parent=1 // pred_check_branch
      %32 = sbr.rel (0) target = $region17
    $region16: #{stock_embedding_forward_ae.1} parent=1 // pred_region
      _
    $region17: #{stock_embedding_forward_ae.1} parent=1 // pred_fallthru
      _
    // Predicated region
    $region18: #{stock_embedding_forward_ae.1} parent=1 // pred_check
      _
    $region19: #{stock_embedding_forward_ae.1} parent=1 // pred_check_branch
      %34 = sbr.rel (0) target = $region21
    $region20: #{stock_embedding_forward_ae.1} parent=1 // pred_region
      %s36 = ssub.s32 16, 16
      %37 = vsyncadd [#allocation3], %s36
      %s39 = sshll.u32 [#allocation2], 4
      %s40 = int_to_ptr.vmem [resolvable:$true] %s39
      %42 = dma.hbm_to_vmem [thread:$0]  %s4, 16, %s40, [#allocation3]
    $region21: #{stock_embedding_forward_ae.1} parent=1 // pred_fallthru
      _
    // Predicated region
    $region22: #{stock_embedding_forward_ae.1} parent=1 // pred_check
      _
    $region23: #{stock_embedding_forward_ae.1} parent=1 // pred_check_branch
      %44 = sbr.rel (0) target = $region25
    $region24: #{stock_embedding_forward_ae.1} parent=1 // pred_region
      %s46 = ssub.s32 128, 128
      %47 = vsyncadd [#allocation6], %s46
      %s48 = sshll.u32 [#allocation5], 4
      %s49 = int_to_ptr.vmem [resolvable:$true] %s48
      %54 = dma.hbm_to_vmem [thread:$0]  %s5, 128, %s49, [#allocation6], 64, 64, 4
    $region25: #{stock_embedding_forward_ae.1} parent=1 // pred_fallthru
      _
    // Predicated region
    $region26: #{stock_embedding_forward_ae.1} parent=1 // pred_check
      _
    $region27: #{stock_embedding_forward_ae.1} parent=1 // pred_check_branch
      %56 = sbr.rel (0) target = $region29
    $region28: #{stock_embedding_forward_ae.1} parent=1 // pred_region
      %s58 = ssub.s32 16, 16
      %59 = vsyncadd [#allocation6], %s58
      %s61 = sshll.u32 [#allocation7], 4
      %s62 = int_to_ptr.vmem [resolvable:$true] %s61
      %64 = dma.hbm_to_vmem [thread:$0]  %s6, 16, %s62, [#allocation6]
    $region29: #{stock_embedding_forward_ae.1} parent=1 // pred_fallthru
      _
    // Predicated region
    $region30: #{stock_embedding_forward_ae.1} parent=1 // pred_check
      _
    $region31: #{stock_embedding_forward_ae.1} parent=1 // pred_check_branch
      %66 = sbr.rel (0) target = $region33
    $region32: #{stock_embedding_forward_ae.1} parent=1 // pred_region
      %s68 = ssub.s32 128, 128
      %69 = vsyncadd [#allocation9], %s68
      %s70 = sshll.u32 [#allocation8], 4
      %s71 = int_to_ptr.vmem [resolvable:$true] %s70
      %76 = dma.hbm_to_vmem [thread:$0]  %s7, 128, %s71, [#allocation9], 64, 64, 4
    $region33: #{stock_embedding_forward_ae.1} parent=1 // pred_fallthru
      _
    // Predicated region
    $region34: #{stock_embedding_forward_ae.1} parent=1 // pred_check
      _
    $region35: #{stock_embedding_forward_ae.1} parent=1 // pred_check_branch
      %78 = sbr.rel (0) target = $region37
    $region36: #{stock_embedding_forward_ae.1} parent=1 // pred_region
      %s80 = ssub.s32 128, 128
      %81 = vsyncadd [#allocation9], %s80
      %s82 = sshll.u32 [#allocation10], 4
      %s83 = int_to_ptr.vmem [resolvable:$true] %s82
      %88 = dma.hbm_to_vmem [thread:$0]  %s8, 128, %s83, [#allocation9], 64, 64, 4
    $region37: #{stock_embedding_forward_ae.1} parent=1 // pred_fallthru
      _
    // Predicated region
    $region38: #{stock_embedding_forward_ae.1} parent=1 // pred_check
      _
    $region39: #{stock_embedding_forward_ae.1} parent=1 // pred_check_branch
      %90 = sbr.rel (0) target = $region41
    $region40: #{stock_embedding_forward_ae.1} parent=1 // pred_region
      _
    $region41: #{stock_embedding_forward_ae.1} parent=1 // pred_fallthru
      _
    // Predicated region
    $region42: #{stock_embedding_forward_ae.1} parent=1 // pred_check
      _
    $region43: #{stock_embedding_forward_ae.1} parent=1 // pred_check_branch
      %92 = sbr.rel (0) target = $region45
    $region44: #{stock_embedding_forward_ae.1} parent=1 // pred_region
      %s94 = ssub.s32 16, 16
      %95 = vsyncadd [#allocation12], %s94
      %s97 = sshll.u32 [#allocation11], 4
      %s98 = int_to_ptr.vmem [resolvable:$true] %s97
      %100 = dma.hbm_to_vmem [thread:$0]  %s10, 16, %s98, [#allocation12]
    $region45: #{stock_embedding_forward_ae.1} parent=1 // pred_fallthru
      _
    // Predicated region
    $region46: #{stock_embedding_forward_ae.1} parent=1 // pred_check
      _
    $region47: #{stock_embedding_forward_ae.1} parent=1 // pred_check_branch
      %102 = sbr.rel (0) target = $region49
    $region48: #{stock_embedding_forward_ae.1} parent=1 // pred_region
      _
    $region49: #{stock_embedding_forward_ae.1} parent=1 // pred_fallthru
      _
    // Predicated region
    $region50: #{stock_embedding_forward_ae.1} parent=1 // pred_check
      _
    $region51: #{stock_embedding_forward_ae.1} parent=1 // pred_check_branch
      %104 = sbr.rel (0) target = $region53
    $region52: #{stock_embedding_forward_ae.1} parent=1 // pred_region
      %s106 = ssub.s32 16, 16
      %107 = vsyncadd [#allocation12], %s106
      %s109 = sshll.u32 [#allocation13], 4
      %s110 = int_to_ptr.vmem [resolvable:$true] %s109
      %112 = dma.hbm_to_vmem [thread:$0]  %s12, 16, %s110, [#allocation12]
    $region53: #{stock_embedding_forward_ae.1} parent=1 // pred_fallthru
      _
    // Predicated region
    $region54: #{stock_embedding_forward_ae.1} parent=1 // pred_check
      _
    $region55: #{stock_embedding_forward_ae.1} parent=1 // pred_check_branch
      %114 = sbr.rel (0) target = $region57
    $region56: #{stock_embedding_forward_ae.1} parent=1 // pred_region
      %115 = dma.done [#allocation3], 16
    $region57: #{stock_embedding_forward_ae.1} parent=1 // pred_fallthru
      _
    // Predicated region
    $region58: #{stock_embedding_forward_ae.1} parent=1 // pred_check
      _
    $region59: #{stock_embedding_forward_ae.1} parent=1 // pred_check_branch
      %117 = sbr.rel (0) target = $region61
    $region60: #{stock_embedding_forward_ae.1} parent=1 // pred_region
      %118 = dma.done [#allocation6], 128
    $region61: #{stock_embedding_forward_ae.1} parent=1 // pred_fallthru
      _
    // Predicated region
    $region62: #{stock_embedding_forward_ae.1} parent=1 // pred_check
      _
    $region63: #{stock_embedding_forward_ae.1} parent=1 // pred_check_branch
      %120 = sbr.rel (0) target = $region65
    $region64: #{stock_embedding_forward_ae.1} parent=1 // pred_region
      %121 = dma.done [#allocation6], 16
    $region65: #{stock_embedding_forward_ae.1} parent=1 // pred_fallthru
      _
    // Predicated region
    $region66: #{stock_embedding_forward_ae.1} parent=1 // pred_check
      _
    $region67: #{stock_embedding_forward_ae.1} parent=1 // pred_check_branch
      %123 = sbr.rel (0) target = $region69
    $region68: #{stock_embedding_forward_ae.1} parent=1 // pred_region
      %124 = dma.done [#allocation9], 128
    $region69: #{stock_embedding_forward_ae.1} parent=1 // pred_fallthru
      _
    // Predicated region
    $region70: #{stock_embedding_forward_ae.1} parent=1 // pred_check
      _
    $region71: #{stock_embedding_forward_ae.1} parent=1 // pred_check_branch
      %126 = sbr.rel (0) target = $region73
    $region72: #{stock_embedding_forward_ae.1} parent=1 // pred_region
      %127 = dma.done [#allocation9], 128
    $region73: #{stock_embedding_forward_ae.1} parent=1 // pred_fallthru
      _
    // Predicated region
    $region74: #{stock_embedding_forward_ae.1} parent=1 // pred_check
      _
    $region75: #{stock_embedding_forward_ae.1} parent=1 // pred_check_branch
      %129 = sbr.rel (0) target = $region77
    $region76: #{stock_embedding_forward_ae.1} parent=1 // pred_region
      %130 = dma.done [#allocation12], 16
    $region77: #{stock_embedding_forward_ae.1} parent=1 // pred_fallthru
      _
    // Predicated region
    $region78: #{stock_embedding_forward_ae.1} parent=1 // pred_check
      _
    $region79: #{stock_embedding_forward_ae.1} parent=1 // pred_check_branch
      %132 = sbr.rel (0) target = $region81
    $region80: #{stock_embedding_forward_ae.1} parent=1 // pred_region
      %133 = dma.done [#allocation12], 16
    $region81: #{stock_embedding_forward_ae.1} parent=1 // pred_fallthru
      _
    %v135 = vld [vmem:[%s1] sm:$0x3]
    %v136 = vld [vmem:[%s2] sm:$0xf]
    %v137 = vld [vmem:[%s2 + $0x4] sm:$0xf]
    %v138 = vld [vmem:[%s3] sm:$0xf]
    %v139 = vld [vmem:[%s3 + $0x4] sm:$0xf]
    %v140 = vld [vmem:[%s3 + $0x8] sm:$0xf]
    %v141 = vld [vmem:[%s3 + $0xc] sm:$0xf]
    %v142 = vld [vmem:[%s3 + $0x10] sm:$0xf]
    %v143 = vld [vmem:[%s3 + $0x14] sm:$0xf]
    %v144 = vld [vmem:[#allocation2] sm:$0x1]
    %v145 = vld [vmem:[#allocation5] sm:$0xf]
    %v146 = vld [vmem:[#allocation5 + $0x4] sm:$0xf]
    %v147 = vld [vmem:[#allocation7] sm:$0x1]
    %v148 = vld [vmem:[#allocation8] sm:$0xf]
    %v149 = vld [vmem:[#allocation8 + $0x4] sm:$0xf]
    %v150 = vld [vmem:[#allocation10] sm:$0xf]
    %v151 = vld [vmem:[#allocation10 + $0x4] sm:$0xf]
    %v152 = vld [vmem:[%s9] sm:$0xf]
    %v153 = vld [vmem:[%s9 + $0x4] sm:$0xf]
    %v154 = vld [vmem:[%s9 + $0x8] sm:$0xf]
    %v155 = vld [vmem:[%s9 + $0xc] sm:$0xf]
    %v156 = vld [vmem:[%s9 + $0x10] sm:$0xf]
    %v157 = vld [vmem:[%s9 + $0x14] sm:$0xf]
    %v158 = vld [vmem:[#allocation11] sm:$0x1]
    %v159 = vld [vmem:[%s11] sm:$0xf]
    %v160 = vld [vmem:[%s11 + $0x4] sm:$0xf]
    %v161 = vld [vmem:[#allocation13] sm:$0x1]
    %v163 = vlaneseq
    %v164 = vshrl.u32 %v163, 7
    %v165 = vsub.s32 0, %v164
    %v166 = vrot.slane %v144, %v165
    %v174 = vunpack.c.l.b16 %v138
    %v175 = vunpack.c.l.b16 %v139
    %v176 = vunpack.c.l.b16 %v140
    %v177 = vunpack.c.l.b16 %v141
    %v178 = vunpack.c.l.b16 %v142
    %v179 = vunpack.c.l.b16 %v143
    %v180 = vpack.c.b16 %v175, %v174
    %v181 = vpack.c.b16 %v177, %v176
    %v182 = vpack.c.b16 %v179, %v178
    %vm186 = vcmask 392192
    %v188 = vsel %vm186, 0, 0
    %190 = vmatprep.subr.bf16.mxu0 0
    %191 = vmatpush1.bf16.msra.mxu0 %v180
    %192 = vmatprep.subr.bf16.mxu0 0
    %193 = vmatpush1.bf16.msra.mxu0 %v181
    %194 = vmatprep.subr.bf16.mxu0 0
    %195 = vmatpush1.bf16.msra.mxu0 %v182
    %196 = vmatprep.subr.bf16.mxu0 0
    %197 = vmatpush1.bf16.msra.mxu0 0
    %198 = vmatprep.subr.bf16.mxu0 0
    %199 = vmatpush1.bf16.msra.mxu0 0
    %200 = vmatprep.subr.bf16.mxu0 0
    %201 = vmatpush1.bf16.msra.mxu0 0
    %202 = vmatprep.subr.bf16.mxu0 0
    %203 = vmatpush1.bf16.msra.mxu0 0
    %204 = vmatprep.subr.bf16.mxu0 0
    %205 = vmatpush1.bf16.msra.mxu0 0
    %206 = vmatprep.subr.bf16.mxu0 0
    %207 = vmatpush1.bf16.msra.mxu0 0
    %208 = vmatprep.subr.bf16.mxu0 0
    %209 = vmatpush1.bf16.msra.mxu0 0
    %210 = vmatprep.subr.bf16.mxu0 0
    %211 = vmatpush1.bf16.msra.mxu0 0
    %212 = vmatprep.subr.bf16.mxu0 0
    %213 = vmatpush1.bf16.msra.mxu0 0
    %214 = vmatprep.subr.bf16.mxu0 0
    %215 = vmatpush1.bf16.msra.mxu0 0
    %216 = vmatprep.subr.bf16.mxu0 0
    %217 = vmatpush1.bf16.msra.mxu0 0
    %218 = vmatprep.subr.bf16.mxu0 0
    %219 = vmatpush1.bf16.msra.mxu0 0
    %220 = vmatprep.subr.bf16.mxu0 0
    %221 = vmatpush1.bf16.msra.mxu0 0
    %222 = vmatprep.mubr.bf16.mxu0 0
    %223 = vmatmul.mubr.bf16.gmra.mrb[0].mxu0 %v188
    %v224 = vpop.f32.mrb[0].mxu0
    %v225 = vadd.f32 %v166, %v224
    %v226 = vpop.f32.mrb[0].mxu0
    %v227 = vpop.f32.mrb[0].mxu0
    %v228 = vpop.f32.mrb[0].mxu0
    %229 = vdwg.mxu0
    %v230 = vld [vmem:[%s0] sm:$0xff]
    %v231 = vpack.c.bf16 %v230, %v230
    %vm232 = vcmask 31744
    %v234 = vsel %vm232, %v231, 0
    %vm236 = vcmask 1041408
    %v238 = vsel %vm236, %v135, 0
    %240 = vmatprep.subr.bf16.mxu0 0
    %241 = vmatpush1.bf16.msra.mxu0 %v238
    %242 = vmatprep.subr.bf16.mxu0 0
    %243 = vmatpush1.bf16.msra.mxu0 0
    %244 = vmatprep.subr.bf16.mxu0 0
    %245 = vmatpush1.bf16.msra.mxu0 0
    %246 = vmatprep.subr.bf16.mxu0 0
    %247 = vmatpush1.bf16.msra.mxu0 0
    %248 = vmatprep.subr.bf16.mxu0 0
    %249 = vmatpush1.bf16.msra.mxu0 0
    %250 = vmatprep.subr.bf16.mxu0 0
    %251 = vmatpush1.bf16.msra.mxu0 0
    %252 = vmatprep.subr.bf16.mxu0 0
    %253 = vmatpush1.bf16.msra.mxu0 0
    %254 = vmatprep.subr.bf16.mxu0 0
    %255 = vmatpush1.bf16.msra.mxu0 0
    %256 = vmatprep.subr.bf16.mxu0 0
    %257 = vmatpush1.bf16.msra.mxu0 0
    %258 = vmatprep.subr.bf16.mxu0 0
    %259 = vmatpush1.bf16.msra.mxu0 0
    %260 = vmatprep.subr.bf16.mxu0 0
    %261 = vmatpush1.bf16.msra.mxu0 0
    %262 = vmatprep.subr.bf16.mxu0 0
    %263 = vmatpush1.bf16.msra.mxu0 0
    %264 = vmatprep.subr.bf16.mxu0 0
    %265 = vmatpush1.bf16.msra.mxu0 0
    %266 = vmatprep.subr.bf16.mxu0 0
    %267 = vmatpush1.bf16.msra.mxu0 0
    %268 = vmatprep.subr.bf16.mxu0 0
    %269 = vmatpush1.bf16.msra.mxu0 0
    %270 = vmatprep.subr.bf16.mxu0 0
    %271 = vmatpush1.bf16.msra.mxu0 0
    %272 = vmatprep.mubr.bf16.mxu0 0
    %273 = vmatmul.mubr.bf16.gmra.mrb[0].mxu0 %v234
    %v274 = vpop.f32.mrb[0].mxu0
    %v275 = vadd.f32 %v225, %v274
    %v276 = vpop.f32.mrb[0].mxu0
    %v277 = vpop.f32.mrb[0].mxu0
    %v278 = vpop.f32.mrb[0].mxu0
    %279 = vdwg.mxu0
    %v280 = vtanh.pop %v275
    %v281 = vpack.c.bf16 %v280, %v280
    %v284 = vunpack.c.l.b16 %v136
    %v285 = vunpack.c.l.b16 %v137
    %v286 = vpack.c.b16 %v285, %v284
    %289 = vrot.lane.b32.xlu0 %v225, 112
    %v290 = vpop.permute.xlu0 %289
    %vm292 = vcmask 130048
    %v294 = vsel %vm292, %v281, 0
    %296 = vmatprep.subr.bf16.mxu0 0
    %297 = vmatpush1.bf16.msra.mxu0 %v286
    %298 = vmatprep.subr.bf16.mxu0 0
    %299 = vmatpush1.bf16.msra.mxu0 0
    %300 = vmatprep.subr.bf16.mxu0 0
    %301 = vmatpush1.bf16.msra.mxu0 0
    %302 = vmatprep.subr.bf16.mxu0 0
    %303 = vmatpush1.bf16.msra.mxu0 0
    %304 = vmatprep.subr.bf16.mxu0 0
    %305 = vmatpush1.bf16.msra.mxu0 0
    %306 = vmatprep.subr.bf16.mxu0 0
    %307 = vmatpush1.bf16.msra.mxu0 0
    %308 = vmatprep.subr.bf16.mxu0 0
    %309 = vmatpush1.bf16.msra.mxu0 0
    %310 = vmatprep.subr.bf16.mxu0 0
    %311 = vmatpush1.bf16.msra.mxu0 0
    %312 = vmatprep.subr.bf16.mxu0 0
    %313 = vmatpush1.bf16.msra.mxu0 0
    %314 = vmatprep.subr.bf16.mxu0 0
    %315 = vmatpush1.bf16.msra.mxu0 0
    %316 = vmatprep.subr.bf16.mxu0 0
    %317 = vmatpush1.bf16.msra.mxu0 0
    %318 = vmatprep.subr.bf16.mxu0 0
    %319 = vmatpush1.bf16.msra.mxu0 0
    %320 = vmatprep.subr.bf16.mxu0 0
    %321 = vmatpush1.bf16.msra.mxu0 0
    %322 = vmatprep.subr.bf16.mxu0 0
    %323 = vmatpush1.bf16.msra.mxu0 0
    %324 = vmatprep.subr.bf16.mxu0 0
    %325 = vmatpush1.bf16.msra.mxu0 0
    %326 = vmatprep.subr.bf16.mxu0 0
    %327 = vmatpush1.bf16.msra.mxu0 0
    %328 = vmatprep.mubr.bf16.mxu0 0
    %329 = vmatmul.mubr.bf16.gmra.mrb[0].mxu0 %v294
    %v330 = vpop.f32.mrb[0].mxu0
    %v331 = vadd.f32 %v290, %v330
    %v332 = vpop.f32.mrb[0].mxu0
    %v333 = vpop.f32.mrb[0].mxu0
    %v334 = vpop.f32.mrb[0].mxu0
    %335 = vdwg.mxu0
    %v336 = vtanh.pop %v331
    %v337 = vpack.c.bf16 %v336, %v336
    %338 = vrot.lane.b32.xlu0 %v286, 112
    %v339 = vpop.permute.xlu0 %338
    %341 = vrot.lane.b32.xlu0 %v225, 96
    %v342 = vpop.permute.xlu0 %341
    %v345 = vsel %vm292, %v337, 0
    %347 = vmatprep.subr.bf16.mxu0 0
    %348 = vmatpush1.bf16.msra.mxu0 %v339
    %349 = vmatprep.subr.bf16.mxu0 0
    %350 = vmatpush1.bf16.msra.mxu0 0
    %351 = vmatprep.subr.bf16.mxu0 0
    %352 = vmatpush1.bf16.msra.mxu0 0
    %353 = vmatprep.subr.bf16.mxu0 0
    %354 = vmatpush1.bf16.msra.mxu0 0
    %355 = vmatprep.subr.bf16.mxu0 0
    %356 = vmatpush1.bf16.msra.mxu0 0
    %357 = vmatprep.subr.bf16.mxu0 0
    %358 = vmatpush1.bf16.msra.mxu0 0
    %359 = vmatprep.subr.bf16.mxu0 0
    %360 = vmatpush1.bf16.msra.mxu0 0
    %361 = vmatprep.subr.bf16.mxu0 0
    %362 = vmatpush1.bf16.msra.mxu0 0
    %363 = vmatprep.subr.bf16.mxu0 0
    %364 = vmatpush1.bf16.msra.mxu0 0
    %365 = vmatprep.subr.bf16.mxu0 0
    %366 = vmatpush1.bf16.msra.mxu0 0
    %367 = vmatprep.subr.bf16.mxu0 0
    %368 = vmatpush1.bf16.msra.mxu0 0
    %369 = vmatprep.subr.bf16.mxu0 0
    %370 = vmatpush1.bf16.msra.mxu0 0
    %371 = vmatprep.subr.bf16.mxu0 0
    %372 = vmatpush1.bf16.msra.mxu0 0
    %373 = vmatprep.subr.bf16.mxu0 0
    %374 = vmatpush1.bf16.msra.mxu0 0
    %375 = vmatprep.subr.bf16.mxu0 0
    %376 = vmatpush1.bf16.msra.mxu0 0
    %377 = vmatprep.subr.bf16.mxu0 0
    %378 = vmatpush1.bf16.msra.mxu0 0
    %379 = vmatprep.mubr.bf16.mxu0 0
    %380 = vmatmul.mubr.bf16.gmra.mrb[0].mxu0 %v345
    %v381 = vpop.f32.mrb[0].mxu0
    %v382 = vadd.f32 %v342, %v381
    %v383 = vpop.f32.mrb[0].mxu0
    %v384 = vpop.f32.mrb[0].mxu0
    %v385 = vpop.f32.mrb[0].mxu0
    %386 = vdwg.mxu0
    %v387 = vtanh.pop %v382
    %v388 = vpack.c.bf16 %v387, %v387
    %v390 = vlaneseq
    %v391 = vshrl.u32 %v390, 7
    %v392 = vsub.s32 0, %v391
    %v393 = vrot.slane %v147, %v392
    %v397 = vunpack.c.l.b16 %v145
    %v398 = vunpack.c.l.b16 %v146
    %v399 = vpack.c.b16 %v398, %v397
    %v402 = vsel %vm292, %v388, 0
    %404 = vmatprep.subr.bf16.mxu0 0
    %405 = vmatpush1.bf16.msra.mxu0 %v399
    %406 = vmatprep.subr.bf16.mxu0 0
    %407 = vmatpush1.bf16.msra.mxu0 0
    %408 = vmatprep.subr.bf16.mxu0 0
    %409 = vmatpush1.bf16.msra.mxu0 0
    %410 = vmatprep.subr.bf16.mxu0 0
    %411 = vmatpush1.bf16.msra.mxu0 0
    %412 = vmatprep.subr.bf16.mxu0 0
    %413 = vmatpush1.bf16.msra.mxu0 0
    %414 = vmatprep.subr.bf16.mxu0 0
    %415 = vmatpush1.bf16.msra.mxu0 0
    %416 = vmatprep.subr.bf16.mxu0 0
    %417 = vmatpush1.bf16.msra.mxu0 0
    %418 = vmatprep.subr.bf16.mxu0 0
    %419 = vmatpush1.bf16.msra.mxu0 0
    %420 = vmatprep.subr.bf16.mxu0 0
    %421 = vmatpush1.bf16.msra.mxu0 0
    %422 = vmatprep.subr.bf16.mxu0 0
    %423 = vmatpush1.bf16.msra.mxu0 0
    %424 = vmatprep.subr.bf16.mxu0 0
    %425 = vmatpush1.bf16.msra.mxu0 0
    %426 = vmatprep.subr.bf16.mxu0 0
    %427 = vmatpush1.bf16.msra.mxu0 0
    %428 = vmatprep.subr.bf16.mxu0 0
    %429 = vmatpush1.bf16.msra.mxu0 0
    %430 = vmatprep.subr.bf16.mxu0 0
    %431 = vmatpush1.bf16.msra.mxu0 0
    %432 = vmatprep.subr.bf16.mxu0 0
    %433 = vmatpush1.bf16.msra.mxu0 0
    %434 = vmatprep.subr.bf16.mxu0 0
    %435 = vmatpush1.bf16.msra.mxu0 0
    %436 = vmatprep.mubr.bf16.mxu0 0
    %437 = vmatmul.mubr.bf16.gmra.mrb[0].mxu0 %v402
    %v438 = vpop.f32.mrb[0].mxu0
    %v439 = vadd.f32 %v393, %v438
    %v440 = vpop.f32.mrb[0].mxu0
    %v441 = vpop.f32.mrb[0].mxu0
    %v442 = vpop.f32.mrb[0].mxu0
    %443 = vdwg.mxu0
    %444 = vst.msk [vmem:[#allocation14] sm:$0xff] %vm292, %v439
    %446 = vrot.lane.b32.xlu0 %v336, 16
    %v447 = vpop.permute.xlu0 %446
    %450 = vrot.lane.b32.xlu0 %v387, 32
    %v451 = vpop.permute.xlu0 %450
    %v453 = vsel %vm292, %v280, %v447
    %vm454 = vcmask 261120
    %v455 = vsel %vm454, %v453, %v451
    %v456 = vpack.c.bf16 %v455, %v455
    %v458 = vsel %vm186, %v456, 0
    %460 = vmatprep.subr.bf16.mxu0 0
    %461 = vmatpush1.bf16.msra.mxu0 %v180
    %462 = vmatprep.subr.bf16.mxu0 0
    %463 = vmatpush1.bf16.msra.mxu0 %v181
    %464 = vmatprep.subr.bf16.mxu0 0
    %465 = vmatpush1.bf16.msra.mxu0 %v182
    %466 = vmatprep.subr.bf16.mxu0 0
    %467 = vmatpush1.bf16.msra.mxu0 0
    %468 = vmatprep.subr.bf16.mxu0 0
    %469 = vmatpush1.bf16.msra.mxu0 0
    %470 = vmatprep.subr.bf16.mxu0 0
    %471 = vmatpush1.bf16.msra.mxu0 0
    %472 = vmatprep.subr.bf16.mxu0 0
    %473 = vmatpush1.bf16.msra.mxu0 0
    %474 = vmatprep.subr.bf16.mxu0 0
    %475 = vmatpush1.bf16.msra.mxu0 0
    %476 = vmatprep.subr.bf16.mxu0 0
    %477 = vmatpush1.bf16.msra.mxu0 0
    %478 = vmatprep.subr.bf16.mxu0 0
    %479 = vmatpush1.bf16.msra.mxu0 0
    %480 = vmatprep.subr.bf16.mxu0 0
    %481 = vmatpush1.bf16.msra.mxu0 0
    %482 = vmatprep.subr.bf16.mxu0 0
    %483 = vmatpush1.bf16.msra.mxu0 0
    %484 = vmatprep.subr.bf16.mxu0 0
    %485 = vmatpush1.bf16.msra.mxu0 0
    %486 = vmatprep.subr.bf16.mxu0 0
    %487 = vmatpush1.bf16.msra.mxu0 0
    %488 = vmatprep.subr.bf16.mxu0 0
    %489 = vmatpush1.bf16.msra.mxu0 0
    %490 = vmatprep.subr.bf16.mxu0 0
    %491 = vmatpush1.bf16.msra.mxu0 0
    %492 = vmatprep.mubr.bf16.mxu0 0
    %493 = vmatmul.mubr.bf16.gmra.mrb[0].mxu0 %v458
    %v494 = vpop.f32.mrb[0].mxu0
    %v495 = vadd.f32 %v166, %v494
    %v496 = vpop.f32.mrb[0].mxu0
    %v497 = vpop.f32.mrb[0].mxu0
    %v498 = vpop.f32.mrb[0].mxu0
    %499 = vdwg.mxu0
    %s500 = scalar_lea.vmem %s0, 8
    %v501 = vld [vmem:[%s500] sm:$0xff]
    %v502 = vpack.c.bf16 %v501, %v501
    %v504 = vsel %vm232, %v502, 0
    %506 = vmatprep.subr.bf16.mxu0 0
    %507 = vmatpush1.bf16.msra.mxu0 %v238
    %508 = vmatprep.subr.bf16.mxu0 0
    %509 = vmatpush1.bf16.msra.mxu0 0
    %510 = vmatprep.subr.bf16.mxu0 0
    %511 = vmatpush1.bf16.msra.mxu0 0
    %512 = vmatprep.subr.bf16.mxu0 0
    %513 = vmatpush1.bf16.msra.mxu0 0
    %514 = vmatprep.subr.bf16.mxu0 0
    %515 = vmatpush1.bf16.msra.mxu0 0
    %516 = vmatprep.subr.bf16.mxu0 0
    %517 = vmatpush1.bf16.msra.mxu0 0
    %518 = vmatprep.subr.bf16.mxu0 0
    %519 = vmatpush1.bf16.msra.mxu0 0
    %520 = vmatprep.subr.bf16.mxu0 0
    %521 = vmatpush1.bf16.msra.mxu0 0
    %522 = vmatprep.subr.bf16.mxu0 0
    %523 = vmatpush1.bf16.msra.mxu0 0
    %524 = vmatprep.subr.bf16.mxu0 0
    %525 = vmatpush1.bf16.msra.mxu0 0
    %526 = vmatprep.subr.bf16.mxu0 0
    %527 = vmatpush1.bf16.msra.mxu0 0
    %528 = vmatprep.subr.bf16.mxu0 0
    %529 = vmatpush1.bf16.msra.mxu0 0
    %530 = vmatprep.subr.bf16.mxu0 0
    %531 = vmatpush1.bf16.msra.mxu0 0
    %532 = vmatprep.subr.bf16.mxu0 0
    %533 = vmatpush1.bf16.msra.mxu0 0
    %534 = vmatprep.subr.bf16.mxu0 0
    %535 = vmatpush1.bf16.msra.mxu0 0
    %536 = vmatprep.subr.bf16.mxu0 0
    %537 = vmatpush1.bf16.msra.mxu0 0
    %538 = vmatprep.mubr.bf16.mxu0 0
    %539 = vmatmul.mubr.bf16.gmra.mrb[0].mxu0 %v504
    %v540 = vpop.f32.mrb[0].mxu0
    %v541 = vadd.f32 %v495, %v540
    %v542 = vpop.f32.mrb[0].mxu0
    %v543 = vpop.f32.mrb[0].mxu0
    %v544 = vpop.f32.mrb[0].mxu0
    %545 = vdwg.mxu0
    %v546 = vtanh.pop %v541
    %v547 = vpack.c.bf16 %v546, %v546
    %549 = vrot.lane.b32.xlu0 %v495, 112
    %v550 = vpop.permute.xlu0 %549
    %v553 = vsel %vm292, %v547, 0
    %555 = vmatprep.subr.bf16.mxu0 0
    %556 = vmatpush1.bf16.msra.mxu0 %v286
    %557 = vmatprep.subr.bf16.mxu0 0
    %558 = vmatpush1.bf16.msra.mxu0 0
    %559 = vmatprep.subr.bf16.mxu0 0
    %560 = vmatpush1.bf16.msra.mxu0 0
    %561 = vmatprep.subr.bf16.mxu0 0
    %562 = vmatpush1.bf16.msra.mxu0 0
    %563 = vmatprep.subr.bf16.mxu0 0
    %564 = vmatpush1.bf16.msra.mxu0 0
    %565 = vmatprep.subr.bf16.mxu0 0
    %566 = vmatpush1.bf16.msra.mxu0 0
    %567 = vmatprep.subr.bf16.mxu0 0
    %568 = vmatpush1.bf16.msra.mxu0 0
    %569 = vmatprep.subr.bf16.mxu0 0
    %570 = vmatpush1.bf16.msra.mxu0 0
    %571 = vmatprep.subr.bf16.mxu0 0
    %572 = vmatpush1.bf16.msra.mxu0 0
    %573 = vmatprep.subr.bf16.mxu0 0
    %574 = vmatpush1.bf16.msra.mxu0 0
    %575 = vmatprep.subr.bf16.mxu0 0
    %576 = vmatpush1.bf16.msra.mxu0 0
    %577 = vmatprep.subr.bf16.mxu0 0
    %578 = vmatpush1.bf16.msra.mxu0 0
    %579 = vmatprep.subr.bf16.mxu0 0
    %580 = vmatpush1.bf16.msra.mxu0 0
    %581 = vmatprep.subr.bf16.mxu0 0
    %582 = vmatpush1.bf16.msra.mxu0 0
    %583 = vmatprep.subr.bf16.mxu0 0
    %584 = vmatpush1.bf16.msra.mxu0 0
    %585 = vmatprep.subr.bf16.mxu0 0
    %586 = vmatpush1.bf16.msra.mxu0 0
    %587 = vmatprep.mubr.bf16.mxu0 0
    %588 = vmatmul.mubr.bf16.gmra.mrb[0].mxu0 %v553
    %v589 = vpop.f32.mrb[0].mxu0
    %v590 = vadd.f32 %v550, %v589
    %v591 = vpop.f32.mrb[0].mxu0
    %v592 = vpop.f32.mrb[0].mxu0
    %v593 = vpop.f32.mrb[0].mxu0
    %594 = vdwg.mxu0
    %v595 = vtanh.pop %v590
    %v596 = vpack.c.bf16 %v595, %v595
    %597 = vrot.lane.b32.xlu0 %v495, 96
    %v598 = vpop.permute.xlu0 %597
    %v601 = vsel %vm292, %v596, 0
    %603 = vmatprep.subr.bf16.mxu0 0
    %604 = vmatpush1.bf16.msra.mxu0 %v339
    %605 = vmatprep.subr.bf16.mxu0 0
    %606 = vmatpush1.bf16.msra.mxu0 0
    %607 = vmatprep.subr.bf16.mxu0 0
    %608 = vmatpush1.bf16.msra.mxu0 0
    %609 = vmatprep.subr.bf16.mxu0 0
    %610 = vmatpush1.bf16.msra.mxu0 0
    %611 = vmatprep.subr.bf16.mxu0 0
    %612 = vmatpush1.bf16.msra.mxu0 0
    %613 = vmatprep.subr.bf16.mxu0 0
    %614 = vmatpush1.bf16.msra.mxu0 0
    %615 = vmatprep.subr.bf16.mxu0 0
    %616 = vmatpush1.bf16.msra.mxu0 0
    %617 = vmatprep.subr.bf16.mxu0 0
    %618 = vmatpush1.bf16.msra.mxu0 0
    %619 = vmatprep.subr.bf16.mxu0 0
    %620 = vmatpush1.bf16.msra.mxu0 0
    %621 = vmatprep.subr.bf16.mxu0 0
    %622 = vmatpush1.bf16.msra.mxu0 0
    %623 = vmatprep.subr.bf16.mxu0 0
    %624 = vmatpush1.bf16.msra.mxu0 0
    %625 = vmatprep.subr.bf16.mxu0 0
    %626 = vmatpush1.bf16.msra.mxu0 0
    %627 = vmatprep.subr.bf16.mxu0 0
    %628 = vmatpush1.bf16.msra.mxu0 0
    %629 = vmatprep.subr.bf16.mxu0 0
    %630 = vmatpush1.bf16.msra.mxu0 0
    %631 = vmatprep.subr.bf16.mxu0 0
    %632 = vmatpush1.bf16.msra.mxu0 0
    %633 = vmatprep.subr.bf16.mxu0 0
    %634 = vmatpush1.bf16.msra.mxu0 0
    %635 = vmatprep.mubr.bf16.mxu0 0
    %636 = vmatmul.mubr.bf16.gmra.mrb[0].mxu0 %v601
    %v637 = vpop.f32.mrb[0].mxu0
    %v638 = vadd.f32 %v598, %v637
    %v639 = vpop.f32.mrb[0].mxu0
    %v640 = vpop.f32.mrb[0].mxu0
    %v641 = vpop.f32.mrb[0].mxu0
    %642 = vdwg.mxu0
    %v643 = vtanh.pop %v638
    %v644 = vpack.c.bf16 %v643, %v643
    %v646 = vsel %vm292, %v644, 0
    %648 = vmatprep.subr.bf16.mxu0 0
    %649 = vmatpush1.bf16.msra.mxu0 %v399
    %650 = vmatprep.subr.bf16.mxu0 0
    %651 = vmatpush1.bf16.msra.mxu0 0
    %652 = vmatprep.subr.bf16.mxu0 0
    %653 = vmatpush1.bf16.msra.mxu0 0
    %654 = vmatprep.subr.bf16.mxu0 0
    %655 = vmatpush1.bf16.msra.mxu0 0
    %656 = vmatprep.subr.bf16.mxu0 0
    %657 = vmatpush1.bf16.msra.mxu0 0
    %658 = vmatprep.subr.bf16.mxu0 0
    %659 = vmatpush1.bf16.msra.mxu0 0
    %660 = vmatprep.subr.bf16.mxu0 0
    %661 = vmatpush1.bf16.msra.mxu0 0
    %662 = vmatprep.subr.bf16.mxu0 0
    %663 = vmatpush1.bf16.msra.mxu0 0
    %664 = vmatprep.subr.bf16.mxu0 0
    %665 = vmatpush1.bf16.msra.mxu0 0
    %666 = vmatprep.subr.bf16.mxu0 0
    %667 = vmatpush1.bf16.msra.mxu0 0
    %668 = vmatprep.subr.bf16.mxu0 0
    %669 = vmatpush1.bf16.msra.mxu0 0
    %670 = vmatprep.subr.bf16.mxu0 0
    %671 = vmatpush1.bf16.msra.mxu0 0
    %672 = vmatprep.subr.bf16.mxu0 0
    %673 = vmatpush1.bf16.msra.mxu0 0
    %674 = vmatprep.subr.bf16.mxu0 0
    %675 = vmatpush1.bf16.msra.mxu0 0
    %676 = vmatprep.subr.bf16.mxu0 0
    %677 = vmatpush1.bf16.msra.mxu0 0
    %678 = vmatprep.subr.bf16.mxu0 0
    %679 = vmatpush1.bf16.msra.mxu0 0
    %680 = vmatprep.mubr.bf16.mxu0 0
    %681 = vmatmul.mubr.bf16.gmra.mrb[0].mxu0 %v646
    %v682 = vpop.f32.mrb[0].mxu0
    %v683 = vadd.f32 %v393, %v682
    %v684 = vpop.f32.mrb[0].mxu0
    %v685 = vpop.f32.mrb[0].mxu0
    %v686 = vpop.f32.mrb[0].mxu0
    %687 = vdwg.mxu0
    %s688 = scalar_lea.vmem [#allocation14], 8
    %689 = vst.msk [vmem:[%s688] sm:$0xff] %vm292, %v683
    %v691 = vlaneseq
    %v692 = vshrl.u32 %v691, 7
    %v693 = vsub.s32 0, %v692
    %v694 = vrot.slane %v158, %v693
    %v702 = vunpack.c.l.b16 %v152
    %v703 = vunpack.c.l.b16 %v153
    %v704 = vunpack.c.l.b16 %v154
    %v705 = vunpack.c.l.b16 %v155
    %v706 = vunpack.c.l.b16 %v156
    %v707 = vunpack.c.l.b16 %v157
    %v708 = vpack.c.b16 %v703, %v702
    %v709 = vpack.c.b16 %v705, %v704
    %v710 = vpack.c.b16 %v707, %v706
    %714 = vmatprep.subr.bf16.mxu0 0
    %715 = vmatpush1.bf16.msra.mxu0 %v708
    %716 = vmatprep.subr.bf16.mxu0 0
    %717 = vmatpush1.bf16.msra.mxu0 %v709
    %718 = vmatprep.subr.bf16.mxu0 0
    %719 = vmatpush1.bf16.msra.mxu0 %v710
    %720 = vmatprep.subr.bf16.mxu0 0
    %721 = vmatpush1.bf16.msra.mxu0 0
    %722 = vmatprep.subr.bf16.mxu0 0
    %723 = vmatpush1.bf16.msra.mxu0 0
    %724 = vmatprep.subr.bf16.mxu0 0
    %725 = vmatpush1.bf16.msra.mxu0 0
    %726 = vmatprep.subr.bf16.mxu0 0
    %727 = vmatpush1.bf16.msra.mxu0 0
    %728 = vmatprep.subr.bf16.mxu0 0
    %729 = vmatpush1.bf16.msra.mxu0 0
    %730 = vmatprep.subr.bf16.mxu0 0
    %731 = vmatpush1.bf16.msra.mxu0 0
    %732 = vmatprep.subr.bf16.mxu0 0
    %733 = vmatpush1.bf16.msra.mxu0 0
    %734 = vmatprep.subr.bf16.mxu0 0
    %735 = vmatpush1.bf16.msra.mxu0 0
    %736 = vmatprep.subr.bf16.mxu0 0
    %737 = vmatpush1.bf16.msra.mxu0 0
    %738 = vmatprep.subr.bf16.mxu0 0
    %739 = vmatpush1.bf16.msra.mxu0 0
    %740 = vmatprep.subr.bf16.mxu0 0
    %741 = vmatpush1.bf16.msra.mxu0 0
    %742 = vmatprep.subr.bf16.mxu0 0
    %743 = vmatpush1.bf16.msra.mxu0 0
    %744 = vmatprep.subr.bf16.mxu0 0
    %745 = vmatpush1.bf16.msra.mxu0 0
    %746 = vmatprep.mubr.bf16.mxu0 0
    %747 = vmatmul.mubr.bf16.gmra.mrb[0].mxu0 %v188
    %v748 = vpop.f32.mrb[0].mxu0
    %v749 = vadd.f32 %v694, %v748
    %v750 = vpop.f32.mrb[0].mxu0
    %v751 = vpop.f32.mrb[0].mxu0
    %v752 = vpop.f32.mrb[0].mxu0
    %753 = vdwg.mxu0
    %v754 = vld [vmem:[#allocation14] sm:$0xff]
    %v755 = vpack.c.bf16 %v754, %v754
    %v758 = vunpack.c.l.b16 %v148
    %v759 = vunpack.c.l.b16 %v149
    %v760 = vpack.c.b16 %v759, %v758
    %v763 = vsel %vm292, %v755, 0
    %765 = vmatprep.subr.bf16.mxu0 0
    %766 = vmatpush1.bf16.msra.mxu0 %v760
    %767 = vmatprep.subr.bf16.mxu0 0
    %768 = vmatpush1.bf16.msra.mxu0 0
    %769 = vmatprep.subr.bf16.mxu0 0
    %770 = vmatpush1.bf16.msra.mxu0 0
    %771 = vmatprep.subr.bf16.mxu0 0
    %772 = vmatpush1.bf16.msra.mxu0 0
    %773 = vmatprep.subr.bf16.mxu0 0
    %774 = vmatpush1.bf16.msra.mxu0 0
    %775 = vmatprep.subr.bf16.mxu0 0
    %776 = vmatpush1.bf16.msra.mxu0 0
    %777 = vmatprep.subr.bf16.mxu0 0
    %778 = vmatpush1.bf16.msra.mxu0 0
    %779 = vmatprep.subr.bf16.mxu0 0
    %780 = vmatpush1.bf16.msra.mxu0 0
    %781 = vmatprep.subr.bf16.mxu0 0
    %782 = vmatpush1.bf16.msra.mxu0 0
    %783 = vmatprep.subr.bf16.mxu0 0
    %784 = vmatpush1.bf16.msra.mxu0 0
    %785 = vmatprep.subr.bf16.mxu0 0
    %786 = vmatpush1.bf16.msra.mxu0 0
    %787 = vmatprep.subr.bf16.mxu0 0
    %788 = vmatpush1.bf16.msra.mxu0 0
    %789 = vmatprep.subr.bf16.mxu0 0
    %790 = vmatpush1.bf16.msra.mxu0 0
    %791 = vmatprep.subr.bf16.mxu0 0
    %792 = vmatpush1.bf16.msra.mxu0 0
    %793 = vmatprep.subr.bf16.mxu0 0
    %794 = vmatpush1.bf16.msra.mxu0 0
    %795 = vmatprep.subr.bf16.mxu0 0
    %796 = vmatpush1.bf16.msra.mxu0 0
    %797 = vmatprep.mubr.bf16.mxu0 0
    %798 = vmatmul.mubr.bf16.gmra.mrb[0].mxu0 %v763
    %v799 = vpop.f32.mrb[0].mxu0
    %v800 = vadd.f32 %v749, %v799
    %v801 = vpop.f32.mrb[0].mxu0
    %v802 = vpop.f32.mrb[0].mxu0
    %v803 = vpop.f32.mrb[0].mxu0
    %804 = vdwg.mxu0
    %v805 = vtanh.pop %v800
    %v806 = vpack.c.bf16 %v805, %v805
    %v809 = vunpack.c.l.b16 %v150
    %v810 = vunpack.c.l.b16 %v151
    %v811 = vpack.c.b16 %v810, %v809
    %814 = vrot.lane.b32.xlu0 %v749, 112
    %v815 = vpop.permute.xlu0 %814
    %v818 = vsel %vm292, %v806, 0
    %820 = vmatprep.subr.bf16.mxu0 0
    %821 = vmatpush1.bf16.msra.mxu0 %v811
    %822 = vmatprep.subr.bf16.mxu0 0
    %823 = vmatpush1.bf16.msra.mxu0 0
    %824 = vmatprep.subr.bf16.mxu0 0
    %825 = vmatpush1.bf16.msra.mxu0 0
    %826 = vmatprep.subr.bf16.mxu0 0
    %827 = vmatpush1.bf16.msra.mxu0 0
    %828 = vmatprep.subr.bf16.mxu0 0
    %829 = vmatpush1.bf16.msra.mxu0 0
    %830 = vmatprep.subr.bf16.mxu0 0
    %831 = vmatpush1.bf16.msra.mxu0 0
    %832 = vmatprep.subr.bf16.mxu0 0
    %833 = vmatpush1.bf16.msra.mxu0 0
    %834 = vmatprep.subr.bf16.mxu0 0
    %835 = vmatpush1.bf16.msra.mxu0 0
    %836 = vmatprep.subr.bf16.mxu0 0
    %837 = vmatpush1.bf16.msra.mxu0 0
    %838 = vmatprep.subr.bf16.mxu0 0
    %839 = vmatpush1.bf16.msra.mxu0 0
    %840 = vmatprep.subr.bf16.mxu0 0
    %841 = vmatpush1.bf16.msra.mxu0 0
    %842 = vmatprep.subr.bf16.mxu0 0
    %843 = vmatpush1.bf16.msra.mxu0 0
    %844 = vmatprep.subr.bf16.mxu0 0
    %845 = vmatpush1.bf16.msra.mxu0 0
    %846 = vmatprep.subr.bf16.mxu0 0
    %847 = vmatpush1.bf16.msra.mxu0 0
    %848 = vmatprep.subr.bf16.mxu0 0
    %849 = vmatpush1.bf16.msra.mxu0 0
    %850 = vmatprep.subr.bf16.mxu0 0
    %851 = vmatpush1.bf16.msra.mxu0 0
    %852 = vmatprep.mubr.bf16.mxu0 0
    %853 = vmatmul.mubr.bf16.gmra.mrb[0].mxu0 %v818
    %v854 = vpop.f32.mrb[0].mxu0
    %v855 = vadd.f32 %v815, %v854
    %v856 = vpop.f32.mrb[0].mxu0
    %v857 = vpop.f32.mrb[0].mxu0
    %v858 = vpop.f32.mrb[0].mxu0
    %859 = vdwg.mxu0
    %v860 = vtanh.pop %v855
    %v861 = vpack.c.bf16 %v860, %v860
    %862 = vrot.lane.b32.xlu0 %v811, 112
    %v863 = vpop.permute.xlu0 %862
    %865 = vrot.lane.b32.xlu0 %v749, 96
    %v866 = vpop.permute.xlu0 %865
    %v869 = vsel %vm292, %v861, 0
    %871 = vmatprep.subr.bf16.mxu0 0
    %872 = vmatpush1.bf16.msra.mxu0 %v863
    %873 = vmatprep.subr.bf16.mxu0 0
    %874 = vmatpush1.bf16.msra.mxu0 0
    %875 = vmatprep.subr.bf16.mxu0 0
    %876 = vmatpush1.bf16.msra.mxu0 0
    %877 = vmatprep.subr.bf16.mxu0 0
    %878 = vmatpush1.bf16.msra.mxu0 0
    %879 = vmatprep.subr.bf16.mxu0 0
    %880 = vmatpush1.bf16.msra.mxu0 0
    %881 = vmatprep.subr.bf16.mxu0 0
    %882 = vmatpush1.bf16.msra.mxu0 0
    %883 = vmatprep.subr.bf16.mxu0 0
    %884 = vmatpush1.bf16.msra.mxu0 0
    %885 = vmatprep.subr.bf16.mxu0 0
    %886 = vmatpush1.bf16.msra.mxu0 0
    %887 = vmatprep.subr.bf16.mxu0 0
    %888 = vmatpush1.bf16.msra.mxu0 0
    %889 = vmatprep.subr.bf16.mxu0 0
    %890 = vmatpush1.bf16.msra.mxu0 0
    %891 = vmatprep.subr.bf16.mxu0 0
    %892 = vmatpush1.bf16.msra.mxu0 0
    %893 = vmatprep.subr.bf16.mxu0 0
    %894 = vmatpush1.bf16.msra.mxu0 0
    %895 = vmatprep.subr.bf16.mxu0 0
    %896 = vmatpush1.bf16.msra.mxu0 0
    %897 = vmatprep.subr.bf16.mxu0 0
    %898 = vmatpush1.bf16.msra.mxu0 0
    %899 = vmatprep.subr.bf16.mxu0 0
    %900 = vmatpush1.bf16.msra.mxu0 0
    %901 = vmatprep.subr.bf16.mxu0 0
    %902 = vmatpush1.bf16.msra.mxu0 0
    %903 = vmatprep.mubr.bf16.mxu0 0
    %904 = vmatmul.mubr.bf16.gmra.mrb[0].mxu0 %v869
    %v905 = vpop.f32.mrb[0].mxu0
    %v906 = vadd.f32 %v866, %v905
    %v907 = vpop.f32.mrb[0].mxu0
    %v908 = vpop.f32.mrb[0].mxu0
    %v909 = vpop.f32.mrb[0].mxu0
    %910 = vdwg.mxu0
    %v911 = vtanh.pop %v906
    %v912 = vpack.c.bf16 %v911, %v911
    %v914 = vlaneseq
    %v915 = vshrl.u32 %v914, 7
    %v916 = vsub.s32 0, %v915
    %v917 = vrot.slane %v161, %v916
    %v921 = vunpack.c.l.b16 %v159
    %v922 = vunpack.c.l.b16 %v160
    %v923 = vpack.c.b16 %v922, %v921
    %v926 = vsel %vm292, %v912, 0
    %928 = vmatprep.subr.bf16.mxu0 0
    %929 = vmatpush1.bf16.msra.mxu0 %v923
    %930 = vmatprep.subr.bf16.mxu0 0
    %931 = vmatpush1.bf16.msra.mxu0 0
    %932 = vmatprep.subr.bf16.mxu0 0
    %933 = vmatpush1.bf16.msra.mxu0 0
    %934 = vmatprep.subr.bf16.mxu0 0
    %935 = vmatpush1.bf16.msra.mxu0 0
    %936 = vmatprep.subr.bf16.mxu0 0
    %937 = vmatpush1.bf16.msra.mxu0 0
    %938 = vmatprep.subr.bf16.mxu0 0
    %939 = vmatpush1.bf16.msra.mxu0 0
    %940 = vmatprep.subr.bf16.mxu0 0
    %941 = vmatpush1.bf16.msra.mxu0 0
    %942 = vmatprep.subr.bf16.mxu0 0
    %943 = vmatpush1.bf16.msra.mxu0 0
    %944 = vmatprep.subr.bf16.mxu0 0
    %945 = vmatpush1.bf16.msra.mxu0 0
    %946 = vmatprep.subr.bf16.mxu0 0
    %947 = vmatpush1.bf16.msra.mxu0 0
    %948 = vmatprep.subr.bf16.mxu0 0
    %949 = vmatpush1.bf16.msra.mxu0 0
    %950 = vmatprep.subr.bf16.mxu0 0
    %951 = vmatpush1.bf16.msra.mxu0 0
    %952 = vmatprep.subr.bf16.mxu0 0
    %953 = vmatpush1.bf16.msra.mxu0 0
    %954 = vmatprep.subr.bf16.mxu0 0
    %955 = vmatpush1.bf16.msra.mxu0 0
    %956 = vmatprep.subr.bf16.mxu0 0
    %957 = vmatpush1.bf16.msra.mxu0 0
    %958 = vmatprep.subr.bf16.mxu0 0
    %959 = vmatpush1.bf16.msra.mxu0 0
    %960 = vmatprep.mubr.bf16.mxu0 0
    %961 = vmatmul.mubr.bf16.gmra.mrb[0].mxu0 %v926
    %v962 = vpop.f32.mrb[0].mxu0
    %v963 = vadd.f32 %v917, %v962
    %v964 = vpop.f32.mrb[0].mxu0
    %v965 = vpop.f32.mrb[0].mxu0
    %v966 = vpop.f32.mrb[0].mxu0
    %967 = vdwg.mxu0
    %968 = vst.msk [vmem:[%s14] sm:$0xff] %vm232, %v963
    %970 = vrot.lane.b32.xlu0 %v860, 16
    %v971 = vpop.permute.xlu0 %970
    %974 = vrot.lane.b32.xlu0 %v911, 32
    %v975 = vpop.permute.xlu0 %974
    %v977 = vsel %vm292, %v805, %v971
    %v978 = vsel %vm454, %v977, %v975
    %v979 = vpack.c.bf16 %v978, %v978
    %v981 = vsel %vm186, %v979, 0
    %983 = vmatprep.subr.bf16.mxu0 0
    %984 = vmatpush1.bf16.msra.mxu0 %v708
    %985 = vmatprep.subr.bf16.mxu0 0
    %986 = vmatpush1.bf16.msra.mxu0 %v709
    %987 = vmatprep.subr.bf16.mxu0 0
    %988 = vmatpush1.bf16.msra.mxu0 %v710
    %989 = vmatprep.subr.bf16.mxu0 0
    %990 = vmatpush1.bf16.msra.mxu0 0
    %991 = vmatprep.subr.bf16.mxu0 0
    %992 = vmatpush1.bf16.msra.mxu0 0
    %993 = vmatprep.subr.bf16.mxu0 0
    %994 = vmatpush1.bf16.msra.mxu0 0
    %995 = vmatprep.subr.bf16.mxu0 0
    %996 = vmatpush1.bf16.msra.mxu0 0
    %997 = vmatprep.subr.bf16.mxu0 0
    %998 = vmatpush1.bf16.msra.mxu0 0
    %999 = vmatprep.subr.bf16.mxu0 0
    %1000 = vmatpush1.bf16.msra.mxu0 0
    %1001 = vmatprep.subr.bf16.mxu0 0
    %1002 = vmatpush1.bf16.msra.mxu0 0
    %1003 = vmatprep.subr.bf16.mxu0 0
    %1004 = vmatpush1.bf16.msra.mxu0 0
    %1005 = vmatprep.subr.bf16.mxu0 0
    %1006 = vmatpush1.bf16.msra.mxu0 0
    %1007 = vmatprep.subr.bf16.mxu0 0
    %1008 = vmatpush1.bf16.msra.mxu0 0
    %1009 = vmatprep.subr.bf16.mxu0 0
    %1010 = vmatpush1.bf16.msra.mxu0 0
    %1011 = vmatprep.subr.bf16.mxu0 0
    %1012 = vmatpush1.bf16.msra.mxu0 0
    %1013 = vmatprep.subr.bf16.mxu0 0
    %1014 = vmatpush1.bf16.msra.mxu0 0
    %1015 = vmatprep.mubr.bf16.mxu0 0
    %1016 = vmatmul.mubr.bf16.gmra.mrb[0].mxu0 %v981
    %v1017 = vpop.f32.mrb[0].mxu0
    %v1018 = vadd.f32 %v694, %v1017
    %v1019 = vpop.f32.mrb[0].mxu0
    %v1020 = vpop.f32.mrb[0].mxu0
    %v1021 = vpop.f32.mrb[0].mxu0
    %1022 = vdwg.mxu0
    %v1023 = vld [vmem:[%s688] sm:$0xff]
    %v1024 = vpack.c.bf16 %v1023, %v1023
    %v1026 = vsel %vm292, %v1024, 0
    %1028 = vmatprep.subr.bf16.mxu0 0
    %1029 = vmatpush1.bf16.msra.mxu0 %v760
    %1030 = vmatprep.subr.bf16.mxu0 0
    %1031 = vmatpush1.bf16.msra.mxu0 0
    %1032 = vmatprep.subr.bf16.mxu0 0
    %1033 = vmatpush1.bf16.msra.mxu0 0
    %1034 = vmatprep.subr.bf16.mxu0 0
    %1035 = vmatpush1.bf16.msra.mxu0 0
    %1036 = vmatprep.subr.bf16.mxu0 0
    %1037 = vmatpush1.bf16.msra.mxu0 0
    %1038 = vmatprep.subr.bf16.mxu0 0
    %1039 = vmatpush1.bf16.msra.mxu0 0
    %1040 = vmatprep.subr.bf16.mxu0 0
    %1041 = vmatpush1.bf16.msra.mxu0 0
    %1042 = vmatprep.subr.bf16.mxu0 0
    %1043 = vmatpush1.bf16.msra.mxu0 0
    %1044 = vmatprep.subr.bf16.mxu0 0
    %1045 = vmatpush1.bf16.msra.mxu0 0
    %1046 = vmatprep.subr.bf16.mxu0 0
    %1047 = vmatpush1.bf16.msra.mxu0 0
    %1048 = vmatprep.subr.bf16.mxu0 0
    %1049 = vmatpush1.bf16.msra.mxu0 0
    %1050 = vmatprep.subr.bf16.mxu0 0
    %1051 = vmatpush1.bf16.msra.mxu0 0
    %1052 = vmatprep.subr.bf16.mxu0 0
    %1053 = vmatpush1.bf16.msra.mxu0 0
    %1054 = vmatprep.subr.bf16.mxu0 0
    %1055 = vmatpush1.bf16.msra.mxu0 0
    %1056 = vmatprep.subr.bf16.mxu0 0
    %1057 = vmatpush1.bf16.msra.mxu0 0
    %1058 = vmatprep.subr.bf16.mxu0 0
    %1059 = vmatpush1.bf16.msra.mxu0 0
    %1060 = vmatprep.mubr.bf16.mxu0 0
    %1061 = vmatmul.mubr.bf16.gmra.mrb[0].mxu0 %v1026
    %v1062 = vpop.f32.mrb[0].mxu0
    %v1063 = vadd.f32 %v1018, %v1062
    %v1064 = vpop.f32.mrb[0].mxu0
    %v1065 = vpop.f32.mrb[0].mxu0
    %v1066 = vpop.f32.mrb[0].mxu0
    %1067 = vdwg.mxu0
    %v1068 = vtanh.pop %v1063
    %v1069 = vpack.c.bf16 %v1068, %v1068
    %1071 = vrot.lane.b32.xlu0 %v1018, 112
    %v1072 = vpop.permute.xlu0 %1071
    %v1075 = vsel %vm292, %v1069, 0
    %1077 = vmatprep.subr.bf16.mxu0 0
    %1078 = vmatpush1.bf16.msra.mxu0 %v811
    %1079 = vmatprep.subr.bf16.mxu0 0
    %1080 = vmatpush1.bf16.msra.mxu0 0
    %1081 = vmatprep.subr.bf16.mxu0 0
    %1082 = vmatpush1.bf16.msra.mxu0 0
    %1083 = vmatprep.subr.bf16.mxu0 0
    %1084 = vmatpush1.bf16.msra.mxu0 0
    %1085 = vmatprep.subr.bf16.mxu0 0
    %1086 = vmatpush1.bf16.msra.mxu0 0
    %1087 = vmatprep.subr.bf16.mxu0 0
    %1088 = vmatpush1.bf16.msra.mxu0 0
    %1089 = vmatprep.subr.bf16.mxu0 0
    %1090 = vmatpush1.bf16.msra.mxu0 0
    %1091 = vmatprep.subr.bf16.mxu0 0
    %1092 = vmatpush1.bf16.msra.mxu0 0
    %1093 = vmatprep.subr.bf16.mxu0 0
    %1094 = vmatpush1.bf16.msra.mxu0 0
    %1095 = vmatprep.subr.bf16.mxu0 0
    %1096 = vmatpush1.bf16.msra.mxu0 0
    %1097 = vmatprep.subr.bf16.mxu0 0
    %1098 = vmatpush1.bf16.msra.mxu0 0
    %1099 = vmatprep.subr.bf16.mxu0 0
    %1100 = vmatpush1.bf16.msra.mxu0 0
    %1101 = vmatprep.subr.bf16.mxu0 0
    %1102 = vmatpush1.bf16.msra.mxu0 0
    %1103 = vmatprep.subr.bf16.mxu0 0
    %1104 = vmatpush1.bf16.msra.mxu0 0
    %1105 = vmatprep.subr.bf16.mxu0 0
    %1106 = vmatpush1.bf16.msra.mxu0 0
    %1107 = vmatprep.subr.bf16.mxu0 0
    %1108 = vmatpush1.bf16.msra.mxu0 0
    %1109 = vmatprep.mubr.bf16.mxu0 0
    %1110 = vmatmul.mubr.bf16.gmra.mrb[0].mxu0 %v1075
    %v1111 = vpop.f32.mrb[0].mxu0
    %v1112 = vadd.f32 %v1072, %v1111
    %v1113 = vpop.f32.mrb[0].mxu0
    %v1114 = vpop.f32.mrb[0].mxu0
    %v1115 = vpop.f32.mrb[0].mxu0
    %1116 = vdwg.mxu0
    %v1117 = vtanh.pop %v1112
    %v1118 = vpack.c.bf16 %v1117, %v1117
    %1119 = vrot.lane.b32.xlu0 %v1018, 96
    %v1120 = vpop.permute.xlu0 %1119
    %v1123 = vsel %vm292, %v1118, 0
    %1125 = vmatprep.subr.bf16.mxu0 0
    %1126 = vmatpush1.bf16.msra.mxu0 %v863
    %1127 = vmatprep.subr.bf16.mxu0 0
    %1128 = vmatpush1.bf16.msra.mxu0 0
    %1129 = vmatprep.subr.bf16.mxu0 0
    %1130 = vmatpush1.bf16.msra.mxu0 0
    %1131 = vmatprep.subr.bf16.mxu0 0
    %1132 = vmatpush1.bf16.msra.mxu0 0
    %1133 = vmatprep.subr.bf16.mxu0 0
    %1134 = vmatpush1.bf16.msra.mxu0 0
    %1135 = vmatprep.subr.bf16.mxu0 0
    %1136 = vmatpush1.bf16.msra.mxu0 0
    %1137 = vmatprep.subr.bf16.mxu0 0
    %1138 = vmatpush1.bf16.msra.mxu0 0
    %1139 = vmatprep.subr.bf16.mxu0 0
    %1140 = vmatpush1.bf16.msra.mxu0 0
    %1141 = vmatprep.subr.bf16.mxu0 0
    %1142 = vmatpush1.bf16.msra.mxu0 0
    %1143 = vmatprep.subr.bf16.mxu0 0
    %1144 = vmatpush1.bf16.msra.mxu0 0
    %1145 = vmatprep.subr.bf16.mxu0 0
    %1146 = vmatpush1.bf16.msra.mxu0 0
    %1147 = vmatprep.subr.bf16.mxu0 0
    %1148 = vmatpush1.bf16.msra.mxu0 0
    %1149 = vmatprep.subr.bf16.mxu0 0
    %1150 = vmatpush1.bf16.msra.mxu0 0
    %1151 = vmatprep.subr.bf16.mxu0 0
    %1152 = vmatpush1.bf16.msra.mxu0 0
    %1153 = vmatprep.subr.bf16.mxu0 0
    %1154 = vmatpush1.bf16.msra.mxu0 0
    %1155 = vmatprep.subr.bf16.mxu0 0
    %1156 = vmatpush1.bf16.msra.mxu0 0
    %1157 = vmatprep.mubr.bf16.mxu0 0
    %1158 = vmatmul.mubr.bf16.gmra.mrb[0].mxu0 %v1123
    %v1159 = vpop.f32.mrb[0].mxu0
    %v1160 = vadd.f32 %v1120, %v1159
    %v1161 = vpop.f32.mrb[0].mxu0
    %v1162 = vpop.f32.mrb[0].mxu0
    %v1163 = vpop.f32.mrb[0].mxu0
    %1164 = vdwg.mxu0
    %v1165 = vtanh.pop %v1160
    %v1166 = vpack.c.bf16 %v1165, %v1165
    %v1168 = vsel %vm292, %v1166, 0
    %1170 = vmatprep.subr.bf16.mxu0 0
    %1171 = vmatpush1.bf16.msra.mxu0 %v923
    %1172 = vmatprep.subr.bf16.mxu0 0
    %1173 = vmatpush1.bf16.msra.mxu0 0
    %1174 = vmatprep.subr.bf16.mxu0 0
    %1175 = vmatpush1.bf16.msra.mxu0 0
    %1176 = vmatprep.subr.bf16.mxu0 0
    %1177 = vmatpush1.bf16.msra.mxu0 0
    %1178 = vmatprep.subr.bf16.mxu0 0
    %1179 = vmatpush1.bf16.msra.mxu0 0
    %1180 = vmatprep.subr.bf16.mxu0 0
    %1181 = vmatpush1.bf16.msra.mxu0 0
    %1182 = vmatprep.subr.bf16.mxu0 0
    %1183 = vmatpush1.bf16.msra.mxu0 0
    %1184 = vmatprep.subr.bf16.mxu0 0
    %1185 = vmatpush1.bf16.msra.mxu0 0
    %1186 = vmatprep.subr.bf16.mxu0 0
    %1187 = vmatpush1.bf16.msra.mxu0 0
    %1188 = vmatprep.subr.bf16.mxu0 0
    %1189 = vmatpush1.bf16.msra.mxu0 0
    %1190 = vmatprep.subr.bf16.mxu0 0
    %1191 = vmatpush1.bf16.msra.mxu0 0
    %1192 = vmatprep.subr.bf16.mxu0 0
    %1193 = vmatpush1.bf16.msra.mxu0 0
    %1194 = vmatprep.subr.bf16.mxu0 0
    %1195 = vmatpush1.bf16.msra.mxu0 0
    %1196 = vmatprep.subr.bf16.mxu0 0
    %1197 = vmatpush1.bf16.msra.mxu0 0
    %1198 = vmatprep.subr.bf16.mxu0 0
    %1199 = vmatpush1.bf16.msra.mxu0 0
    %1200 = vmatprep.subr.bf16.mxu0 0
    %1201 = vmatpush1.bf16.msra.mxu0 0
    %1202 = vmatprep.mubr.bf16.mxu0 0
    %1203 = vmatmul.mubr.bf16.gmra.mrb[0].mxu0 %v1168
    %v1204 = vpop.f32.mrb[0].mxu0
    %v1205 = vadd.f32 %v917, %v1204
    %v1206 = vpop.f32.mrb[0].mxu0
    %v1207 = vpop.f32.mrb[0].mxu0
    %v1208 = vpop.f32.mrb[0].mxu0
    %1209 = vdwg.mxu0
    %s1210 = scalar_lea.vmem %s14, 8
    %1211 = vst.msk [vmem:[%s1210] sm:$0xff] %vm232, %v1205
    // Predicated region
    $region82: #{stock_embedding_forward_ae.1} parent=1 // pred_check
      _
    $region83: #{stock_embedding_forward_ae.1} parent=1 // pred_check_branch
      %1213 = sbr.rel (0) target = $region85
    $region84: #{stock_embedding_forward_ae.1} parent=1 // pred_region
      %s1215 = ssub.s32 256, 256
      %1216 = vsyncadd [#allocation4], %s1215
      %s1217 = sshll.u32 [#allocation14], 4
      %s1218 = int_to_ptr.vmem [resolvable:$true] %s1217
      %1223 = dma.vmem_to_hbm [thread:$0]  %s1218, 256, %s13, [#allocation4], 128, 128, 8
    $region85: #{stock_embedding_forward_ae.1} parent=1 // pred_fallthru
      _
    // Predicated region
    $region86: #{stock_embedding_forward_ae.1} parent=1 // pred_check
      _
    $region87: #{stock_embedding_forward_ae.1} parent=1 // pred_check_branch
      %1225 = sbr.rel (0) target = $region89
    $region88: #{stock_embedding_forward_ae.1} parent=1 // pred_region
      _
    $region89: #{stock_embedding_forward_ae.1} parent=1 // pred_fallthru
      _
    // Predicated region
    $region90: #{stock_embedding_forward_ae.1} parent=1 // pred_check
      _
    $region91: #{stock_embedding_forward_ae.1} parent=1 // pred_check_branch
      %1227 = sbr.rel (0) target = $region93
    $region92: #{stock_embedding_forward_ae.1} parent=1 // pred_region
      %1228 = dma.done [#allocation4], 256
    $region93: #{stock_embedding_forward_ae.1} parent=1 // pred_fallthru
      _
    // Predicated region
    $region94: #{stock_embedding_forward_ae.1} parent=1 // pred_check
      _
    $region95: #{stock_embedding_forward_ae.1} parent=1 // pred_check_branch
      %1230 = sbr.rel (0) target = $region97
    $region96: #{stock_embedding_forward_ae.1} parent=1 // pred_region
      _
    $region97: #{stock_embedding_forward_ae.1} parent=1 // pred_fallthru
      _
    %1231 = vsyncpa [#allocation3], 1
    %1232 = vsyncpa [#allocation6], 1
    %1233 = vsyncpa [#allocation9], 1
    %1234 = vsyncpa [#allocation12], 1
    %1235 = vsyncpa [#allocation4], 1

</llo_original>
